<compile_context>
chip_gen: v7x
topology: tpu7x:2x2x1
jax: 0.10.0
libtpu: 0.0.40
codegen_flags: <defaults>
</compile_context>

<pallas_src>
import functools

import jax
import jax.numpy as jnp
from jax.experimental import pallas as pl
from jax.experimental.pallas import tpu as pltpu

KSIZE = 3  # conv kernel size


def awru_kernel(scales_ref,                    # SMEM (2,)  [res_scale, x_scale]
                xprev_ref, xcur_ref, xnext_ref,  # VMEM (1, C, TW) row tiles
                w1_ref, b1_ref,                # VMEM (9, C, C), (C, 1)
                w2_ref, b2_ref,                # VMEM (9, C, C), (C, 1)
                out_ref,                       # VMEM (1, C, TW)
                *, H, W, tile_rows, pad, compute_dtype):
    C = xcur_ref.shape[1]
    TW = tile_rows * W              # lanes produced by this grid step
    HWw = TW + 2 * pad              # lanes in the halo'd input window
    E = W + 1                       # conv tap reach in flat lanes (|dy*W+dx| <= E)
    TWh = TW + 2 * E                # hidden lanes the second conv needs
    s0 = pad - E                    # hidden sub-window start inside the window

    r = pl.program_id(1)
    base = r * TW - pad             # global flat pixel index of window lane 0

    # ---- assemble the halo'd, lane-dense window (C, HWw) ----
    halo_lo = xprev_ref[0, :, TW - pad:]        # last `pad` lanes of the tile above
    mid = xcur_ref[0]                           # current tile, lane-dense
    halo_hi = xnext_ref[0, :, :pad]             # first `pad` lanes of the tile below
    win = jnp.concatenate([halo_lo, mid, halo_hi], axis=-1).astype(jnp.float32)

    # ---- validity masks (zero padding, all in flat lane coordinates) ----
    idx_w = jax.lax.broadcasted_iota(jnp.int32, (1, HWw), 1)
    gp_w = base + idx_w
    win_ok = jnp.logical_and(gp_w >= 0, gp_w < H * W)
    win = jnp.where(win_ok, win, 0.0)           # rows above/below the image -> 0

    idx_h = jax.lax.broadcasted_iota(jnp.int32, (1, TWh), 1)
    gp_h = base + s0 + idx_h                    # global index of each hidden lane
    h_ok = jnp.logical_and(gp_h >= 0, gp_h < H * W)
    col_h = (idx_h + (W - 1)) % W               # image column of each hidden lane
    idx_o = jax.lax.broadcasted_iota(jnp.int32, (1, TW), 1)
    col_o = idx_o % W                           # image column of each output lane

    def conv3x3(img, start, width, w_ref, b_ref, col):
        """3x3 conv as 9 accumulating MXU dots on lane-shifted views of img."""
        acc = None
        for t in range(KSIZE * KSIZE):
            dy, dx = t // KSIZE - 1, t % KSIZE - 1
            off = dy * W + dx
            tap = img[:, start + off:start + off + width]      # static lane slice
            if dx == -1:
                tap = jnp.where(col >= 1, tap, 0.0)            # source col w-1 valid
            elif dx == 1:
                tap = jnp.where(col <= W - 2, tap, 0.0)        # source col w+1 valid
            part = jnp.dot(w_ref[t].astype(compute_dtype),
                           tap.astype(compute_dtype),
                           preferred_element_type=jnp.float32)
            acc = part if acc is None else acc + part
        return acc + b_ref[...]

    # conv1 + ReLU over exactly the hidden lanes conv2 needs.
    h = jnp.maximum(conv3x3(win, s0, TWh, w1_ref, b1_ref, col_h), 0.0)
    h = jnp.where(h_ok, h, 0.0)                 # zero-pad hidden outside the image

    # conv2 over exactly the output tile lanes.
    y = conv3x3(h, E, TW, w2_ref, b2_ref, col_o)

    res_scale = scales_ref[0]
    x_scale = scales_ref[1]
    out = res_scale * y + x_scale * mid.astype(jnp.float32)
    out_ref[0] = out.astype(out_ref.dtype)


def weight_norm_effective(v, g):
    """PyTorch weight_norm (dim=0): w = g * v / ||v||_(cin,kh,kw)."""
    norm = jnp.sqrt(jnp.sum(v * v, axis=(1, 2, 3), keepdims=True))
    return (g.reshape(-1, 1, 1, 1) / norm) * v


def _choose_tile_rows(H, W, C):
    """Divisor of H giving lane-dense (multiple-of-128-lane) row tiles with a
    modest per-block VMEM footprint; prefers >= 2 tiles (pipelining/megacore)."""
    budget = 2 * 1024 * 1024        # f32 bytes per (C, tile_rows*W) block
    cands = [ht for ht in range(3, H + 1)
             if H % ht == 0 and (ht * W) % 128 == 0 and 4 * C * ht * W <= budget]
    if not cands:
        return H                    # whole image fallback (block = full dim)
    multi = [ht for ht in cands if H // ht >= 2]
    return max(multi) if multi else max(cands)


def awru_forward(x_nchw, params, *, compute_dtype=jnp.float32, tile_rows=None):
    """x_nchw: (N, C, H, W) float32. Returns (N, C, H, W)."""
    N, C, H, W = x_nchw.shape
    K = KSIZE
    HW = H * W

    # Effective (weight-normalized) weights as per-tap (K*K, Cout, Cin) slabs.
    w1 = weight_norm_effective(params["v1"], params["g1"])
    w2 = weight_norm_effective(params["v2"], params["g2"])
    w1_taps = jnp.transpose(w1, (2, 3, 0, 1)).reshape(K * K, C, C)
    w2_taps = jnp.transpose(w2, (2, 3, 0, 1)).reshape(K * K, C, C)
    b1 = params["b1"].reshape(C, 1)
    b2 = params["b2"].reshape(C, 1)
    scales = jnp.stack([params["res_scale"], params["x_scale"]]).astype(jnp.float32)

    # Channel-major, lane-dense flat layout (free reshape; no pad / no transpose).
    x_flat = x_nchw.reshape(N, C, HW)

    if tile_rows is None:
        tile_rows = _choose_tile_rows(H, W, C)
    assert H % tile_rows == 0, "tile_rows must divide H"
    R = H // tile_rows
    TW = tile_rows * W

    # Halo lanes around each tile: two 3x3 conv rings = 2*W + 2 flat lanes,
    # rounded so the halo'd window stays a multiple of 128 lanes when possible.
    pad = 2 * W + 2
    if TW % 128 == 0:
        pad_rounded = -(-pad // 64) * 64
        if pad_rounded <= TW:
            pad = pad_rounded
    if pad > TW:
        raise ValueError(f"rows too small for halo'd tiling (tile_rows={tile_rows}, W={W})")

    kernel = functools.partial(awru_kernel, H=H, W=W, tile_rows=tile_rows,
                               pad=pad, compute_dtype=compute_dtype)

    x_spec_prev = pl.BlockSpec((1, C, TW), lambda n, r: (n, 0, jnp.maximum(r - 1, 0)))
    x_spec_cur = pl.BlockSpec((1, C, TW), lambda n, r: (n, 0, r))
    x_spec_next = pl.BlockSpec((1, C, TW),
                               lambda n, r: (n, 0, jnp.minimum(r + 1, R - 1)))
    w_spec = pl.BlockSpec((K * K, C, C), lambda n, r: (0, 0, 0))   # constant: no re-DMA
    b_spec = pl.BlockSpec((C, 1), lambda n, r: (0, 0))

    flops = int(N * R * 2 * (2 * K * K * C * C * (TW + 2 * pad)))
    bytes_accessed = int(4 * (4 * N * C * HW + 2 * (K * K * C * C + C) + 2))
    cost = pl.CostEstimate(flops=flops, transcendentals=0,
                           bytes_accessed=bytes_accessed)

    out_flat = pl.pallas_call(
        kernel,
        out_shape=jax.ShapeDtypeStruct((N, C, HW), x_nchw.dtype),
        grid_spec=pltpu.PrefetchScalarGridSpec(
            num_scalar_prefetch=0,
            grid=(N, R),
            in_specs=[
                pl.BlockSpec(memory_space=pltpu.MemorySpace.SMEM),  # scales
                x_spec_prev, x_spec_cur, x_spec_next,               # halo'd row tiles
                w_spec, b_spec, w_spec, b_spec,                     # weights / biases
            ],
            out_specs=pl.BlockSpec((1, C, TW), lambda n, r: (n, 0, r)),  # lane-dense
        ),
        compiler_params=pltpu.CompilerParams(
            dimension_semantics=("parallel", "parallel")),
        cost_estimate=cost,
    )(scales, x_flat, x_flat, x_flat, w1_taps, b1, w2_taps, b2)

    return out_flat.reshape(N, C, H, W)


def awru_reference(x_nchw, params):
    """Pure-JAX reference using lax.conv (matches PyTorch semantics)."""
    w1 = weight_norm_effective(params["v1"], params["g1"])
    w2 = weight_norm_effective(params["v2"], params["g2"])
    dn = ("NCHW", "OIHW", "NCHW")
    y = jax.lax.conv_general_dilated(x_nchw, w1, (1, 1), "SAME",
                                     dimension_numbers=dn)
    y = y + params["b1"].reshape(1, -1, 1, 1)
    y = jnp.maximum(y, 0.0)
    y = jax.lax.conv_general_dilated(y, w2, (1, 1), "SAME",
                                     dimension_numbers=dn)
    y = y + params["b2"].reshape(1, -1, 1, 1)
    return params["res_scale"] * y + params["x_scale"] * x_nchw


def init_params(key, nf):
    k = jax.random.split(key, 6)
    v1 = jax.random.normal(k[0], (nf, nf, KSIZE, KSIZE), jnp.float32) * 0.1
    v2 = jax.random.normal(k[1], (nf, nf, KSIZE, KSIZE), jnp.float32) * 0.1
    g1 = 1.0 + 0.1 * jax.random.normal(k[2], (nf,), jnp.float32)
    g2 = 1.0 + 0.1 * jax.random.normal(k[3], (nf,), jnp.float32)
    b1 = 0.05 * jax.random.normal(k[4], (nf,), jnp.float32)
    b2 = 0.05 * jax.random.normal(k[5], (nf,), jnp.float32)
    return {
        "v1": v1, "g1": g1, "b1": b1,
        "v2": v2, "g2": g2, "b2": b2,
        "res_scale": jnp.float32(1.0),   # Scale(1)
        "x_scale": jnp.float32(1.0),     # Scale(1)
    }


if __name__ == "__main__":
    key = jax.random.PRNGKey(0)
    kx, kp = jax.random.split(key)

    N, C, H, W = 2, 4, 16, 16            # NCHW, as the PyTorch module expects
    x = jax.random.normal(kx, (N, C, H, W), jnp.float32)
    params = init_params(kp, C)

    out = awru_forward(x, params)        # fp32 MXU path (bf16 gated by compute_dtype)
    out = jax.block_until_ready(out)

    ref = awru_reference(x, params)
    assert out.shape == ref.shape == (N, C, H, W)
    assert jnp.max(jnp.abs(out - ref)) < 1e-4, "Pallas AWRU mismatch vs reference"

    print("KERNEL_OK")
</pallas_src>

<mosaic_0001>
module attributes {stable_mosaic.version = 11 : i64} {
  func.func @awru_kernel(%arg0: i32, %arg1: i32, %arg2: memref<2xf32, #tpu.memory_space<smem>>, %arg3: memref<1x4x128xf32, #tpu.memory_space<vmem>>, %arg4: memref<1x4x128xf32, #tpu.memory_space<vmem>>, %arg5: memref<1x4x128xf32, #tpu.memory_space<vmem>>, %arg6: memref<9x4x4xf32, #tpu.memory_space<vmem>>, %arg7: memref<4x1xf32, #tpu.memory_space<vmem>>, %arg8: memref<9x4x4xf32, #tpu.memory_space<vmem>>, %arg9: memref<4x1xf32, #tpu.memory_space<vmem>>, %arg10: memref<1x4x128xf32, #tpu.memory_space<vmem>>) attributes {dimension_semantics = [#tpu.dimension_semantics<parallel>, #tpu.dimension_semantics<parallel>], iteration_bounds = array<i64: 2, 2>, scalar_prefetch = 0 : i64, scratch_operands = 0 : i64, tpu.core_type = #tpu.core_type<tc>, window_params = [{transform_indices = @transform_0, window_bounds = array<i64: 2>}, {transform_indices = @transform_1, window_bounds = array<i64: 1, 4, 128>}, {transform_indices = @transform_2, window_bounds = array<i64: 1, 4, 128>}, {transform_indices = @transform_3, window_bounds = array<i64: 1, 4, 128>}, {pipeline_mode = #tpu.pipeline_mode<synchronous>, transform_indices = @transform_4, window_bounds = array<i64: 9, 4, 4>}, {pipeline_mode = #tpu.pipeline_mode<synchronous>, transform_indices = @transform_5, window_bounds = array<i64: 4, 1>}, {pipeline_mode = #tpu.pipeline_mode<synchronous>, transform_indices = @transform_6, window_bounds = array<i64: 9, 4, 4>}, {pipeline_mode = #tpu.pipeline_mode<synchronous>, transform_indices = @transform_7, window_bounds = array<i64: 4, 1>}, {transform_indices = @transform_8, window_bounds = array<i64: 1, 4, 128>}]} {
    %c128_i32 = arith.constant 128 : i32
    %0 = arith.muli %arg1, %c128_i32 : i32
    %c64_i32 = arith.constant 64 : i32
    %1 = arith.subi %0, %c64_i32 : i32
    %c0 = arith.constant 0 : index
    %c0_0 = arith.constant 0 : index
    %c64 = arith.constant 64 : index
    %2 = vector.load %arg3[%c0, %c0_0, %c64] : memref<1x4x128xf32, #tpu.memory_space<vmem>>, vector<1x4x64xf32>
    %3 = vector.shape_cast %2 : vector<1x4x64xf32> to vector<4x64xf32>
    %c0_1 = arith.constant 0 : index
    %c0_2 = arith.constant 0 : index
    %c0_3 = arith.constant 0 : index
    %4 = vector.load %arg4[%c0_1, %c0_2, %c0_3] : memref<1x4x128xf32, #tpu.memory_space<vmem>>, vector<1x4x128xf32>
    %5 = vector.shape_cast %4 : vector<1x4x128xf32> to vector<4x128xf32>
    %c0_4 = arith.constant 0 : index
    %c0_5 = arith.constant 0 : index
    %c0_6 = arith.constant 0 : index
    %6 = vector.load %arg5[%c0_4, %c0_5, %c0_6] : memref<1x4x128xf32, #tpu.memory_space<vmem>>, vector<1x4x64xf32>
    %7 = vector.shape_cast %6 : vector<1x4x64xf32> to vector<4x64xf32>
    %8 = tpu.concatenate %3, %5, %7 in 1 : vector<4x64xf32>, vector<4x128xf32>, vector<4x64xf32> -> vector<4x256xf32>
    %9 = tpu.iota {dimensions = array<i32: 1>} : vector<1x256xi32>
    %10 = vector.broadcast %1 : i32 to vector<1x256xi32>
    %11 = arith.addi %10, %9 : vector<1x256xi32>
    %c0_i32 = arith.constant 0 : i32
    %12 = vector.broadcast %c0_i32 : i32 to vector<1x256xi32>
    %13 = arith.cmpi sge, %11, %12 : vector<1x256xi32>
    %c256_i32 = arith.constant 256 : i32
    %14 = vector.broadcast %c256_i32 : i32 to vector<1x256xi32>
    %15 = arith.cmpi slt, %11, %14 : vector<1x256xi32>
    %16 = arith.andi %13, %15 : vector<1x256xi1>
    %cst = arith.constant 0.000000e+00 : f32
    %17 = vector.shape_cast %16 : vector<1x256xi1> to vector<1x256xi1>
    %18 = vector.broadcast %17 : vector<1x256xi1> to vector<4x256xi1>
    %19 = vector.broadcast %cst : f32 to vector<4x256xf32>
    %20 = arith.select %18, %8, %19 : vector<4x256xi1>, vector<4x256xf32>
    %21 = tpu.iota {dimensions = array<i32: 1>} : vector<1x162xi32>
    %c47_i32 = arith.constant 47 : i32
    %22 = arith.addi %1, %c47_i32 : i32
    %23 = vector.broadcast %22 : i32 to vector<1x162xi32>
    %24 = arith.addi %23, %21 : vector<1x162xi32>
    %c0_i32_7 = arith.constant 0 : i32
    %25 = vector.broadcast %c0_i32_7 : i32 to vector<1x162xi32>
    %26 = arith.cmpi sge, %24, %25 : vector<1x162xi32>
    %c256_i32_8 = arith.constant 256 : i32
    %27 = vector.broadcast %c256_i32_8 : i32 to vector<1x162xi32>
    %28 = arith.cmpi slt, %24, %27 : vector<1x162xi32>
    %29 = arith.andi %26, %28 : vector<1x162xi1>
    %c15_i32 = arith.constant 15 : i32
    %30 = vector.broadcast %c15_i32 : i32 to vector<1x162xi32>
    %31 = arith.addi %21, %30 : vector<1x162xi32>
    %c16_i32 = arith.constant 16 : i32
    %c0_i32_9 = arith.constant 0 : i32
    %32 = arith.cmpi eq, %c16_i32, %c0_i32_9 : i32
    %c1_i32 = arith.constant 1 : i32
    %33 = arith.select %32, %c1_i32, %c16_i32 : i32
    %34 = vector.broadcast %33 : i32 to vector<1x162xi32>
    %35 = arith.remsi %31, %34 : vector<1x162xi32>
    %c0_i32_10 = arith.constant 0 : i32
    %36 = vector.broadcast %c0_i32_10 : i32 to vector<1x162xi32>
    %37 = arith.cmpi ne, %35, %36 : vector<1x162xi32>
    %c0_i32_11 = arith.constant 0 : i32
    %38 = vector.broadcast %c0_i32_11 : i32 to vector<1x162xi32>
    %39 = arith.cmpi slt, %35, %38 : vector<1x162xi32>
    %c0_i32_12 = arith.constant 0 : i32
    %40 = arith.cmpi slt, %33, %c0_i32_12 : i32
    %41 = vector.broadcast %40 : i1 to vector<1x162xi1>
    %42 = vector.broadcast %41 : vector<1x162xi1> to vector<1x162xi1>
    %43 = arith.xori %39, %42 : vector<1x162xi1>
    %44 = arith.andi %43, %37 : vector<1x162xi1>
    %45 = vector.broadcast %33 : i32 to vector<1x162xi32>
    %46 = arith.addi %35, %45 : vector<1x162xi32>
    %47 = arith.select %44, %46, %35 : vector<1x162xi1>, vector<1x162xi32>
    %48 = tpu.iota {dimensions = array<i32: 1>} : vector<1x128xi32>
    %c16_i32_13 = arith.constant 16 : i32
    %c0_i32_14 = arith.constant 0 : i32
    %49 = arith.cmpi eq, %c16_i32_13, %c0_i32_14 : i32
    %c1_i32_15 = arith.constant 1 : i32
    %50 = arith.select %49, %c1_i32_15, %c16_i32_13 : i32
    %51 = vector.broadcast %50 : i32 to vector<1x128xi32>
    %52 = arith.remsi %48, %51 : vector<1x128xi32>
    %c0_i32_16 = arith.constant 0 : i32
    %53 = vector.broadcast %c0_i32_16 : i32 to vector<1x128xi32>
    %54 = arith.cmpi ne, %52, %53 : vector<1x128xi32>
    %c0_i32_17 = arith.constant 0 : i32
    %55 = vector.broadcast %c0_i32_17 : i32 to vector<1x128xi32>
    %56 = arith.cmpi slt, %52, %55 : vector<1x128xi32>
    %c0_i32_18 = arith.constant 0 : i32
    %57 = arith.cmpi slt, %50, %c0_i32_18 : i32
    %58 = vector.broadcast %57 : i1 to vector<1x128xi1>
    %59 = vector.broadcast %58 : vector<1x128xi1> to vector<1x128xi1>
    %60 = arith.xori %56, %59 : vector<1x128xi1>
    %61 = arith.andi %60, %54 : vector<1x128xi1>
    %62 = vector.broadcast %50 : i32 to vector<1x128xi32>
    %63 = arith.addi %52, %62 : vector<1x128xi32>
    %64 = arith.select %61, %63, %52 : vector<1x128xi1>, vector<1x128xi32>
    %65 = vector.extract_strided_slice %20 {offsets = [0, 30], sizes = [4, 162], strides = [1, 1]} : vector<4x256xf32> to vector<4x162xf32>
    %c1_i32_19 = arith.constant 1 : i32
    %66 = vector.broadcast %c1_i32_19 : i32 to vector<1x162xi32>
    %67 = arith.cmpi sge, %47, %66 : vector<1x162xi32>
    %cst_20 = arith.constant 0.000000e+00 : f32
    %68 = vector.shape_cast %67 : vector<1x162xi1> to vector<1x162xi1>
    %69 = vector.broadcast %68 : vector<1x162xi1> to vector<4x162xi1>
    %70 = vector.broadcast %cst_20 : f32 to vector<4x162xf32>
    %71 = arith.select %69, %65, %70 : vector<4x162xi1>, vector<4x162xf32>
    %c0_21 = arith.constant 0 : index
    %c0_22 = arith.constant 0 : index
    %c0_23 = arith.constant 0 : index
    %72 = vector.load %arg6[%c0_21, %c0_22, %c0_23] : memref<9x4x4xf32, #tpu.memory_space<vmem>>, vector<1x4x4xf32>
    %73 = vector.shape_cast %72 : vector<1x4x4xf32> to vector<4x4xf32>
    %cst_24 = arith.constant dense<0.000000e+00> : vector<4x162xf32>
    %74 = tpu.matmul %73, %71, %cst_24 {dimension_numbers = #tpu.dot_dimension_numbers<[1], [0], [0], [1], [0, 0, 1, 1], [], []>} : vector<4x4xf32>, vector<4x162xf32>, vector<4x162xf32> -> vector<4x162xf32>
    %75 = vector.extract_strided_slice %20 {offsets = [0, 31], sizes = [4, 162], strides = [1, 1]} : vector<4x256xf32> to vector<4x162xf32>
    %c1 = arith.constant 1 : index
    %c0_25 = arith.constant 0 : index
    %c0_26 = arith.constant 0 : index
    %76 = vector.load %arg6[%c1, %c0_25, %c0_26] : memref<9x4x4xf32, #tpu.memory_space<vmem>>, vector<1x4x4xf32>
    %77 = vector.shape_cast %76 : vector<1x4x4xf32> to vector<4x4xf32>
    %cst_27 = arith.constant dense<0.000000e+00> : vector<4x162xf32>
    %78 = tpu.matmul %77, %75, %cst_27 {dimension_numbers = #tpu.dot_dimension_numbers<[1], [0], [0], [1], [0, 0, 1, 1], [], []>} : vector<4x4xf32>, vector<4x162xf32>, vector<4x162xf32> -> vector<4x162xf32>
    %79 = arith.addf %74, %78 : vector<4x162xf32>
    %80 = vector.extract_strided_slice %20 {offsets = [0, 32], sizes = [4, 162], strides = [1, 1]} : vector<4x256xf32> to vector<4x162xf32>
    %c14_i32 = arith.constant 14 : i32
    %81 = vector.broadcast %c14_i32 : i32 to vector<1x162xi32>
    %82 = arith.cmpi sle, %47, %81 : vector<1x162xi32>
    %cst_28 = arith.constant 0.000000e+00 : f32
    %83 = vector.shape_cast %82 : vector<1x162xi1> to vector<1x162xi1>
    %84 = vector.broadcast %83 : vector<1x162xi1> to vector<4x162xi1>
    %85 = vector.broadcast %cst_28 : f32 to vector<4x162xf32>
    %86 = arith.select %84, %80, %85 : vector<4x162xi1>, vector<4x162xf32>
    %c2 = arith.constant 2 : index
    %c0_29 = arith.constant 0 : index
    %c0_30 = arith.constant 0 : index
    %87 = vector.load %arg6[%c2, %c0_29, %c0_30] : memref<9x4x4xf32, #tpu.memory_space<vmem>>, vector<1x4x4xf32>
    %88 = vector.shape_cast %87 : vector<1x4x4xf32> to vector<4x4xf32>
    %cst_31 = arith.constant dense<0.000000e+00> : vector<4x162xf32>
    %89 = tpu.matmul %88, %86, %cst_31 {dimension_numbers = #tpu.dot_dimension_numbers<[1], [0], [0], [1], [0, 0, 1, 1], [], []>} : vector<4x4xf32>, vector<4x162xf32>, vector<4x162xf32> -> vector<4x162xf32>
    %90 = arith.addf %79, %89 : vector<4x162xf32>
    %91 = vector.extract_strided_slice %20 {offsets = [0, 46], sizes = [4, 162], strides = [1, 1]} : vector<4x256xf32> to vector<4x162xf32>
    %c1_i32_32 = arith.constant 1 : i32
    %92 = vector.broadcast %c1_i32_32 : i32 to vector<1x162xi32>
    %93 = arith.cmpi sge, %47, %92 : vector<1x162xi32>
    %cst_33 = arith.constant 0.000000e+00 : f32
    %94 = vector.shape_cast %93 : vector<1x162xi1> to vector<1x162xi1>
    %95 = vector.broadcast %94 : vector<1x162xi1> to vector<4x162xi1>
    %96 = vector.broadcast %cst_33 : f32 to vector<4x162xf32>
    %97 = arith.select %95, %91, %96 : vector<4x162xi1>, vector<4x162xf32>
    %c3 = arith.constant 3 : index
    %c0_34 = arith.constant 0 : index
    %c0_35 = arith.constant 0 : index
    %98 = vector.load %arg6[%c3, %c0_34, %c0_35] : memref<9x4x4xf32, #tpu.memory_space<vmem>>, vector<1x4x4xf32>
    %99 = vector.shape_cast %98 : vector<1x4x4xf32> to vector<4x4xf32>
    %cst_36 = arith.constant dense<0.000000e+00> : vector<4x162xf32>
    %100 = tpu.matmul %99, %97, %cst_36 {dimension_numbers = #tpu.dot_dimension_numbers<[1], [0], [0], [1], [0, 0, 1, 1], [], []>} : vector<4x4xf32>, vector<4x162xf32>, vector<4x162xf32> -> vector<4x162xf32>
    %101 = arith.addf %90, %100 : vector<4x162xf32>
    %102 = vector.extract_strided_slice %20 {offsets = [0, 47], sizes = [4, 162], strides = [1, 1]} : vector<4x256xf32> to vector<4x162xf32>
    %c4 = arith.constant 4 : index
    %c0_37 = arith.constant 0 : index
    %c0_38 = arith.constant 0 : index
    %103 = vector.load %arg6[%c4, %c0_37, %c0_38] : memref<9x4x4xf32, #tpu.memory_space<vmem>>, vector<1x4x4xf32>
    %104 = vector.shape_cast %103 : vector<1x4x4xf32> to vector<4x4xf32>
    %cst_39 = arith.constant dense<0.000000e+00> : vector<4x162xf32>
    %105 = tpu.matmul %104, %102, %cst_39 {dimension_numbers = #tpu.dot_dimension_numbers<[1], [0], [0], [1], [0, 0, 1, 1], [], []>} : vector<4x4xf32>, vector<4x162xf32>, vector<4x162xf32> -> vector<4x162xf32>
    %106 = arith.addf %101, %105 : vector<4x162xf32>
    %107 = vector.extract_strided_slice %20 {offsets = [0, 48], sizes = [4, 162], strides = [1, 1]} : vector<4x256xf32> to vector<4x162xf32>
    %c14_i32_40 = arith.constant 14 : i32
    %108 = vector.broadcast %c14_i32_40 : i32 to vector<1x162xi32>
    %109 = arith.cmpi sle, %47, %108 : vector<1x162xi32>
    %cst_41 = arith.constant 0.000000e+00 : f32
    %110 = vector.shape_cast %109 : vector<1x162xi1> to vector<1x162xi1>
    %111 = vector.broadcast %110 : vector<1x162xi1> to vector<4x162xi1>
    %112 = vector.broadcast %cst_41 : f32 to vector<4x162xf32>
    %113 = arith.select %111, %107, %112 : vector<4x162xi1>, vector<4x162xf32>
    %c5 = arith.constant 5 : index
    %c0_42 = arith.constant 0 : index
    %c0_43 = arith.constant 0 : index
    %114 = vector.load %arg6[%c5, %c0_42, %c0_43] : memref<9x4x4xf32, #tpu.memory_space<vmem>>, vector<1x4x4xf32>
    %115 = vector.shape_cast %114 : vector<1x4x4xf32> to vector<4x4xf32>
    %cst_44 = arith.constant dense<0.000000e+00> : vector<4x162xf32>
    %116 = tpu.matmul %115, %113, %cst_44 {dimension_numbers = #tpu.dot_dimension_numbers<[1], [0], [0], [1], [0, 0, 1, 1], [], []>} : vector<4x4xf32>, vector<4x162xf32>, vector<4x162xf32> -> vector<4x162xf32>
    %117 = arith.addf %106, %116 : vector<4x162xf32>
    %118 = vector.extract_strided_slice %20 {offsets = [0, 62], sizes = [4, 162], strides = [1, 1]} : vector<4x256xf32> to vector<4x162xf32>
    %c1_i32_45 = arith.constant 1 : i32
    %119 = vector.broadcast %c1_i32_45 : i32 to vector<1x162xi32>
    %120 = arith.cmpi sge, %47, %119 : vector<1x162xi32>
    %cst_46 = arith.constant 0.000000e+00 : f32
    %121 = vector.shape_cast %120 : vector<1x162xi1> to vector<1x162xi1>
    %122 = vector.broadcast %121 : vector<1x162xi1> to vector<4x162xi1>
    %123 = vector.broadcast %cst_46 : f32 to vector<4x162xf32>
    %124 = arith.select %122, %118, %123 : vector<4x162xi1>, vector<4x162xf32>
    %c6 = arith.constant 6 : index
    %c0_47 = arith.constant 0 : index
    %c0_48 = arith.constant 0 : index
    %125 = vector.load %arg6[%c6, %c0_47, %c0_48] : memref<9x4x4xf32, #tpu.memory_space<vmem>>, vector<1x4x4xf32>
    %126 = vector.shape_cast %125 : vector<1x4x4xf32> to vector<4x4xf32>
    %cst_49 = arith.constant dense<0.000000e+00> : vector<4x162xf32>
    %127 = tpu.matmul %126, %124, %cst_49 {dimension_numbers = #tpu.dot_dimension_numbers<[1], [0], [0], [1], [0, 0, 1, 1], [], []>} : vector<4x4xf32>, vector<4x162xf32>, vector<4x162xf32> -> vector<4x162xf32>
    %128 = arith.addf %117, %127 : vector<4x162xf32>
    %129 = vector.extract_strided_slice %20 {offsets = [0, 63], sizes = [4, 162], strides = [1, 1]} : vector<4x256xf32> to vector<4x162xf32>
    %c7 = arith.constant 7 : index
    %c0_50 = arith.constant 0 : index
    %c0_51 = arith.constant 0 : index
    %130 = vector.load %arg6[%c7, %c0_50, %c0_51] : memref<9x4x4xf32, #tpu.memory_space<vmem>>, vector<1x4x4xf32>
    %131 = vector.shape_cast %130 : vector<1x4x4xf32> to vector<4x4xf32>
    %cst_52 = arith.constant dense<0.000000e+00> : vector<4x162xf32>
    %132 = tpu.matmul %131, %129, %cst_52 {dimension_numbers = #tpu.dot_dimension_numbers<[1], [0], [0], [1], [0, 0, 1, 1], [], []>} : vector<4x4xf32>, vector<4x162xf32>, vector<4x162xf32> -> vector<4x162xf32>
    %133 = arith.addf %128, %132 : vector<4x162xf32>
    %134 = vector.extract_strided_slice %20 {offsets = [0, 64], sizes = [4, 162], strides = [1, 1]} : vector<4x256xf32> to vector<4x162xf32>
    %c14_i32_53 = arith.constant 14 : i32
    %135 = vector.broadcast %c14_i32_53 : i32 to vector<1x162xi32>
    %136 = arith.cmpi sle, %47, %135 : vector<1x162xi32>
    %cst_54 = arith.constant 0.000000e+00 : f32
    %137 = vector.shape_cast %136 : vector<1x162xi1> to vector<1x162xi1>
    %138 = vector.broadcast %137 : vector<1x162xi1> to vector<4x162xi1>
    %139 = vector.broadcast %cst_54 : f32 to vector<4x162xf32>
    %140 = arith.select %138, %134, %139 : vector<4x162xi1>, vector<4x162xf32>
    %c8 = arith.constant 8 : index
    %c0_55 = arith.constant 0 : index
    %c0_56 = arith.constant 0 : index
    %141 = vector.load %arg6[%c8, %c0_55, %c0_56] : memref<9x4x4xf32, #tpu.memory_space<vmem>>, vector<1x4x4xf32>
    %142 = vector.shape_cast %141 : vector<1x4x4xf32> to vector<4x4xf32>
    %cst_57 = arith.constant dense<0.000000e+00> : vector<4x162xf32>
    %143 = tpu.matmul %142, %140, %cst_57 {dimension_numbers = #tpu.dot_dimension_numbers<[1], [0], [0], [1], [0, 0, 1, 1], [], []>} : vector<4x4xf32>, vector<4x162xf32>, vector<4x162xf32> -> vector<4x162xf32>
    %144 = arith.addf %133, %143 : vector<4x162xf32>
    %c0_58 = arith.constant 0 : index
    %c0_59 = arith.constant 0 : index
    %145 = vector.load %arg7[%c0_58, %c0_59] : memref<4x1xf32, #tpu.memory_space<vmem>>, vector<4x1xf32>
    %146 = vector.broadcast %145 : vector<4x1xf32> to vector<4x162xf32>
    %147 = arith.addf %144, %146 : vector<4x162xf32>
    %cst_60 = arith.constant 0.000000e+00 : f32
    %148 = vector.broadcast %cst_60 : f32 to vector<4x162xf32>
    %149 = arith.maximumf %147, %148 : vector<4x162xf32>
    %cst_61 = arith.constant 0.000000e+00 : f32
    %150 = vector.shape_cast %29 : vector<1x162xi1> to vector<1x162xi1>
    %151 = vector.broadcast %150 : vector<1x162xi1> to vector<4x162xi1>
    %152 = vector.broadcast %cst_61 : f32 to vector<4x162xf32>
    %153 = arith.select %151, %149, %152 : vector<4x162xi1>, vector<4x162xf32>
    %154 = vector.extract_strided_slice %153 {offsets = [0, 0], sizes = [4, 128], strides = [1, 1]} : vector<4x162xf32> to vector<4x128xf32>
    %c1_i32_62 = arith.constant 1 : i32
    %155 = vector.broadcast %c1_i32_62 : i32 to vector<1x128xi32>
    %156 = arith.cmpi sge, %64, %155 : vector<1x128xi32>
    %cst_63 = arith.constant 0.000000e+00 : f32
    %157 = vector.shape_cast %156 : vector<1x128xi1> to vector<1x128xi1>
    %158 = vector.broadcast %157 : vector<1x128xi1> to vector<4x128xi1>
    %159 = vector.broadcast %cst_63 : f32 to vector<4x128xf32>
    %160 = arith.select %158, %154, %159 : vector<4x128xi1>, vector<4x128xf32>
    %c0_64 = arith.constant 0 : index
    %c0_65 = arith.constant 0 : index
    %c0_66 = arith.constant 0 : index
    %161 = vector.load %arg8[%c0_64, %c0_65, %c0_66] : memref<9x4x4xf32, #tpu.memory_space<vmem>>, vector<1x4x4xf32>
    %162 = vector.shape_cast %161 : vector<1x4x4xf32> to vector<4x4xf32>
    %cst_67 = arith.constant dense<0.000000e+00> : vector<4x128xf32>
    %163 = tpu.matmul %162, %160, %cst_67 {dimension_numbers = #tpu.dot_dimension_numbers<[1], [0], [0], [1], [0, 0, 1, 1], [], []>} : vector<4x4xf32>, vector<4x128xf32>, vector<4x128xf32> -> vector<4x128xf32>
    %164 = vector.extract_strided_slice %153 {offsets = [0, 1], sizes = [4, 128], strides = [1, 1]} : vector<4x162xf32> to vector<4x128xf32>
    %c1_68 = arith.constant 1 : index
    %c0_69 = arith.constant 0 : index
    %c0_70 = arith.constant 0 : index
    %165 = vector.load %arg8[%c1_68, %c0_69, %c0_70] : memref<9x4x4xf32, #tpu.memory_space<vmem>>, vector<1x4x4xf32>
    %166 = vector.shape_cast %165 : vector<1x4x4xf32> to vector<4x4xf32>
    %cst_71 = arith.constant dense<0.000000e+00> : vector<4x128xf32>
    %167 = tpu.matmul %166, %164, %cst_71 {dimension_numbers = #tpu.dot_dimension_numbers<[1], [0], [0], [1], [0, 0, 1, 1], [], []>} : vector<4x4xf32>, vector<4x128xf32>, vector<4x128xf32> -> vector<4x128xf32>
    %168 = arith.addf %163, %167 : vector<4x128xf32>
    %169 = vector.extract_strided_slice %153 {offsets = [0, 2], sizes = [4, 128], strides = [1, 1]} : vector<4x162xf32> to vector<4x128xf32>
    %c14_i32_72 = arith.constant 14 : i32
    %170 = vector.broadcast %c14_i32_72 : i32 to vector<1x128xi32>
    %171 = arith.cmpi sle, %64, %170 : vector<1x128xi32>
    %cst_73 = arith.constant 0.000000e+00 : f32
    %172 = vector.shape_cast %171 : vector<1x128xi1> to vector<1x128xi1>
    %173 = vector.broadcast %172 : vector<1x128xi1> to vector<4x128xi1>
    %174 = vector.broadcast %cst_73 : f32 to vector<4x128xf32>
    %175 = arith.select %173, %169, %174 : vector<4x128xi1>, vector<4x128xf32>
    %c2_74 = arith.constant 2 : index
    %c0_75 = arith.constant 0 : index
    %c0_76 = arith.constant 0 : index
    %176 = vector.load %arg8[%c2_74, %c0_75, %c0_76] : memref<9x4x4xf32, #tpu.memory_space<vmem>>, vector<1x4x4xf32>
    %177 = vector.shape_cast %176 : vector<1x4x4xf32> to vector<4x4xf32>
    %cst_77 = arith.constant dense<0.000000e+00> : vector<4x128xf32>
    %178 = tpu.matmul %177, %175, %cst_77 {dimension_numbers = #tpu.dot_dimension_numbers<[1], [0], [0], [1], [0, 0, 1, 1], [], []>} : vector<4x4xf32>, vector<4x128xf32>, vector<4x128xf32> -> vector<4x128xf32>
    %179 = arith.addf %168, %178 : vector<4x128xf32>
    %180 = vector.extract_strided_slice %153 {offsets = [0, 16], sizes = [4, 128], strides = [1, 1]} : vector<4x162xf32> to vector<4x128xf32>
    %c1_i32_78 = arith.constant 1 : i32
    %181 = vector.broadcast %c1_i32_78 : i32 to vector<1x128xi32>
    %182 = arith.cmpi sge, %64, %181 : vector<1x128xi32>
    %cst_79 = arith.constant 0.000000e+00 : f32
    %183 = vector.shape_cast %182 : vector<1x128xi1> to vector<1x128xi1>
    %184 = vector.broadcast %183 : vector<1x128xi1> to vector<4x128xi1>
    %185 = vector.broadcast %cst_79 : f32 to vector<4x128xf32>
    %186 = arith.select %184, %180, %185 : vector<4x128xi1>, vector<4x128xf32>
    %c3_80 = arith.constant 3 : index
    %c0_81 = arith.constant 0 : index
    %c0_82 = arith.constant 0 : index
    %187 = vector.load %arg8[%c3_80, %c0_81, %c0_82] : memref<9x4x4xf32, #tpu.memory_space<vmem>>, vector<1x4x4xf32>
    %188 = vector.shape_cast %187 : vector<1x4x4xf32> to vector<4x4xf32>
    %cst_83 = arith.constant dense<0.000000e+00> : vector<4x128xf32>
    %189 = tpu.matmul %188, %186, %cst_83 {dimension_numbers = #tpu.dot_dimension_numbers<[1], [0], [0], [1], [0, 0, 1, 1], [], []>} : vector<4x4xf32>, vector<4x128xf32>, vector<4x128xf32> -> vector<4x128xf32>
    %190 = arith.addf %179, %189 : vector<4x128xf32>
    %191 = vector.extract_strided_slice %153 {offsets = [0, 17], sizes = [4, 128], strides = [1, 1]} : vector<4x162xf32> to vector<4x128xf32>
    %c4_84 = arith.constant 4 : index
    %c0_85 = arith.constant 0 : index
    %c0_86 = arith.constant 0 : index
    %192 = vector.load %arg8[%c4_84, %c0_85, %c0_86] : memref<9x4x4xf32, #tpu.memory_space<vmem>>, vector<1x4x4xf32>
    %193 = vector.shape_cast %192 : vector<1x4x4xf32> to vector<4x4xf32>
    %cst_87 = arith.constant dense<0.000000e+00> : vector<4x128xf32>
    %194 = tpu.matmul %193, %191, %cst_87 {dimension_numbers = #tpu.dot_dimension_numbers<[1], [0], [0], [1], [0, 0, 1, 1], [], []>} : vector<4x4xf32>, vector<4x128xf32>, vector<4x128xf32> -> vector<4x128xf32>
    %195 = arith.addf %190, %194 : vector<4x128xf32>
    %196 = vector.extract_strided_slice %153 {offsets = [0, 18], sizes = [4, 128], strides = [1, 1]} : vector<4x162xf32> to vector<4x128xf32>
    %c14_i32_88 = arith.constant 14 : i32
    %197 = vector.broadcast %c14_i32_88 : i32 to vector<1x128xi32>
    %198 = arith.cmpi sle, %64, %197 : vector<1x128xi32>
    %cst_89 = arith.constant 0.000000e+00 : f32
    %199 = vector.shape_cast %198 : vector<1x128xi1> to vector<1x128xi1>
    %200 = vector.broadcast %199 : vector<1x128xi1> to vector<4x128xi1>
    %201 = vector.broadcast %cst_89 : f32 to vector<4x128xf32>
    %202 = arith.select %200, %196, %201 : vector<4x128xi1>, vector<4x128xf32>
    %c5_90 = arith.constant 5 : index
    %c0_91 = arith.constant 0 : index
    %c0_92 = arith.constant 0 : index
    %203 = vector.load %arg8[%c5_90, %c0_91, %c0_92] : memref<9x4x4xf32, #tpu.memory_space<vmem>>, vector<1x4x4xf32>
    %204 = vector.shape_cast %203 : vector<1x4x4xf32> to vector<4x4xf32>
    %cst_93 = arith.constant dense<0.000000e+00> : vector<4x128xf32>
    %205 = tpu.matmul %204, %202, %cst_93 {dimension_numbers = #tpu.dot_dimension_numbers<[1], [0], [0], [1], [0, 0, 1, 1], [], []>} : vector<4x4xf32>, vector<4x128xf32>, vector<4x128xf32> -> vector<4x128xf32>
    %206 = arith.addf %195, %205 : vector<4x128xf32>
    %207 = vector.extract_strided_slice %153 {offsets = [0, 32], sizes = [4, 128], strides = [1, 1]} : vector<4x162xf32> to vector<4x128xf32>
    %c1_i32_94 = arith.constant 1 : i32
    %208 = vector.broadcast %c1_i32_94 : i32 to vector<1x128xi32>
    %209 = arith.cmpi sge, %64, %208 : vector<1x128xi32>
    %cst_95 = arith.constant 0.000000e+00 : f32
    %210 = vector.shape_cast %209 : vector<1x128xi1> to vector<1x128xi1>
    %211 = vector.broadcast %210 : vector<1x128xi1> to vector<4x128xi1>
    %212 = vector.broadcast %cst_95 : f32 to vector<4x128xf32>
    %213 = arith.select %211, %207, %212 : vector<4x128xi1>, vector<4x128xf32>
    %c6_96 = arith.constant 6 : index
    %c0_97 = arith.constant 0 : index
    %c0_98 = arith.constant 0 : index
    %214 = vector.load %arg8[%c6_96, %c0_97, %c0_98] : memref<9x4x4xf32, #tpu.memory_space<vmem>>, vector<1x4x4xf32>
    %215 = vector.shape_cast %214 : vector<1x4x4xf32> to vector<4x4xf32>
    %cst_99 = arith.constant dense<0.000000e+00> : vector<4x128xf32>
    %216 = tpu.matmul %215, %213, %cst_99 {dimension_numbers = #tpu.dot_dimension_numbers<[1], [0], [0], [1], [0, 0, 1, 1], [], []>} : vector<4x4xf32>, vector<4x128xf32>, vector<4x128xf32> -> vector<4x128xf32>
    %217 = arith.addf %206, %216 : vector<4x128xf32>
    %218 = vector.extract_strided_slice %153 {offsets = [0, 33], sizes = [4, 128], strides = [1, 1]} : vector<4x162xf32> to vector<4x128xf32>
    %c7_100 = arith.constant 7 : index
    %c0_101 = arith.constant 0 : index
    %c0_102 = arith.constant 0 : index
    %219 = vector.load %arg8[%c7_100, %c0_101, %c0_102] : memref<9x4x4xf32, #tpu.memory_space<vmem>>, vector<1x4x4xf32>
    %220 = vector.shape_cast %219 : vector<1x4x4xf32> to vector<4x4xf32>
    %cst_103 = arith.constant dense<0.000000e+00> : vector<4x128xf32>
    %221 = tpu.matmul %220, %218, %cst_103 {dimension_numbers = #tpu.dot_dimension_numbers<[1], [0], [0], [1], [0, 0, 1, 1], [], []>} : vector<4x4xf32>, vector<4x128xf32>, vector<4x128xf32> -> vector<4x128xf32>
    %222 = arith.addf %217, %221 : vector<4x128xf32>
    %223 = vector.extract_strided_slice %153 {offsets = [0, 34], sizes = [4, 128], strides = [1, 1]} : vector<4x162xf32> to vector<4x128xf32>
    %c14_i32_104 = arith.constant 14 : i32
    %224 = vector.broadcast %c14_i32_104 : i32 to vector<1x128xi32>
    %225 = arith.cmpi sle, %64, %224 : vector<1x128xi32>
    %cst_105 = arith.constant 0.000000e+00 : f32
    %226 = vector.shape_cast %225 : vector<1x128xi1> to vector<1x128xi1>
    %227 = vector.broadcast %226 : vector<1x128xi1> to vector<4x128xi1>
    %228 = vector.broadcast %cst_105 : f32 to vector<4x128xf32>
    %229 = arith.select %227, %223, %228 : vector<4x128xi1>, vector<4x128xf32>
    %c8_106 = arith.constant 8 : index
    %c0_107 = arith.constant 0 : index
    %c0_108 = arith.constant 0 : index
    %230 = vector.load %arg8[%c8_106, %c0_107, %c0_108] : memref<9x4x4xf32, #tpu.memory_space<vmem>>, vector<1x4x4xf32>
    %231 = vector.shape_cast %230 : vector<1x4x4xf32> to vector<4x4xf32>
    %cst_109 = arith.constant dense<0.000000e+00> : vector<4x128xf32>
    %232 = tpu.matmul %231, %229, %cst_109 {dimension_numbers = #tpu.dot_dimension_numbers<[1], [0], [0], [1], [0, 0, 1, 1], [], []>} : vector<4x4xf32>, vector<4x128xf32>, vector<4x128xf32> -> vector<4x128xf32>
    %233 = arith.addf %222, %232 : vector<4x128xf32>
    %c0_110 = arith.constant 0 : index
    %c0_111 = arith.constant 0 : index
    %234 = vector.load %arg9[%c0_110, %c0_111] : memref<4x1xf32, #tpu.memory_space<vmem>>, vector<4x1xf32>
    %235 = vector.broadcast %234 : vector<4x1xf32> to vector<4x128xf32>
    %236 = arith.addf %233, %235 : vector<4x128xf32>
    %c0_112 = arith.constant 0 : index
    %237 = memref.load %arg2[%c0_112] : memref<2xf32, #tpu.memory_space<smem>>
    %c1_113 = arith.constant 1 : index
    %238 = memref.load %arg2[%c1_113] : memref<2xf32, #tpu.memory_space<smem>>
    %239 = vector.broadcast %237 : f32 to vector<4x128xf32>
    %240 = arith.mulf %239, %236 : vector<4x128xf32>
    %241 = vector.broadcast %238 : f32 to vector<4x128xf32>
    %242 = arith.mulf %241, %5 : vector<4x128xf32>
    %243 = arith.addf %240, %242 : vector<4x128xf32>
    %c0_114 = arith.constant 0 : index
    %c0_115 = arith.constant 0 : index
    %c0_116 = arith.constant 0 : index
    %244 = vector.load %arg10[%c0_114, %c0_115, %c0_116] : memref<1x4x128xf32, #tpu.memory_space<vmem>>, vector<1x4x128xf32>
    %245 = vector.shape_cast %244 : vector<1x4x128xf32> to vector<4x128xf32>
    %246 = vector.shape_cast %243 : vector<4x128xf32> to vector<1x4x128xf32>
    tpu.vector_store %arg10[%c0_114, %c0_115, %c0_116], %246 {strides = array<i32>} : memref<1x4x128xf32, #tpu.memory_space<vmem>>, vector<1x4x128xf32>,
    return
  }
  func.func @transform_0(%arg0: i32, %arg1: i32) -> i32 {
    %c0_i32 = arith.constant 0 : i32
    %c0_i32_0 = arith.constant 0 : i32
    return %c0_i32 : i32
  }
  func.func @transform_1(%arg0: i32, %arg1: i32) -> (i32, i32, i32) {
    %c1_i32 = arith.constant 1 : i32
    %0 = arith.subi %arg1, %c1_i32 : i32
    %c0_i32 = arith.constant 0 : i32
    %1 = arith.maxsi %0, %c0_i32 : i32
    %c0_i32_0 = arith.constant 0 : i32
    %c0_i32_1 = arith.constant 0 : i32
    return %arg0, %c0_i32_0, %1 : i32, i32, i32
  }
  func.func @transform_2(%arg0: i32, %arg1: i32) -> (i32, i32, i32) {
    %c0_i32 = arith.constant 0 : i32
    %c0_i32_0 = arith.constant 0 : i32
    return %arg0, %c0_i32, %arg1 : i32, i32, i32
  }
  func.func @transform_3(%arg0: i32, %arg1: i32) -> (i32, i32, i32) {
    %c1_i32 = arith.constant 1 : i32
    %0 = arith.addi %arg1, %c1_i32 : i32
    %c1_i32_0 = arith.constant 1 : i32
    %1 = arith.minsi %0, %c1_i32_0 : i32
    %c0_i32 = arith.constant 0 : i32
    %c0_i32_1 = arith.constant 0 : i32
    return %arg0, %c0_i32, %1 : i32, i32, i32
  }
  func.func @transform_4(%arg0: i32, %arg1: i32) -> (i32, i32, i32) {
    %c0_i32 = arith.constant 0 : i32
    %c0_i32_0 = arith.constant 0 : i32
    %c0_i32_1 = arith.constant 0 : i32
    %c0_i32_2 = arith.constant 0 : i32
    return %c0_i32, %c0_i32_0, %c0_i32_1 : i32, i32, i32
  }
  func.func @transform_5(%arg0: i32, %arg1: i32) -> (i32, i32) {
    %c0_i32 = arith.constant 0 : i32
    %c0_i32_0 = arith.constant 0 : i32
    %c0_i32_1 = arith.constant 0 : i32
    return %c0_i32, %c0_i32_0 : i32, i32
  }
  func.func @transform_6(%arg0: i32, %arg1: i32) -> (i32, i32, i32) {
    %c0_i32 = arith.constant 0 : i32
    %c0_i32_0 = arith.constant 0 : i32
    %c0_i32_1 = arith.constant 0 : i32
    %c0_i32_2 = arith.constant 0 : i32
    return %c0_i32, %c0_i32_0, %c0_i32_1 : i32, i32, i32
  }
  func.func @transform_7(%arg0: i32, %arg1: i32) -> (i32, i32) {
    %c0_i32 = arith.constant 0 : i32
    %c0_i32_0 = arith.constant 0 : i32
    %c0_i32_1 = arith.constant 0 : i32
    return %c0_i32, %c0_i32_0 : i32, i32
  }
  func.func @transform_8(%arg0: i32, %arg1: i32) -> (i32, i32, i32) {
    %c0_i32 = arith.constant 0 : i32
    %c0_i32_0 = arith.constant 0 : i32
    return %arg0, %c0_i32, %arg1 : i32, i32, i32
  }
}

</mosaic_0001>

<llo_original>
// kernel: tpu_custom_call.1
$region0: #{tpu_custom_call.1}
  #allocation0 [shape = 'u32[]', space=smem, size = 0x4, offset = 0x4, fixed_abs, tag = 'smem constant byte address 0x4 - core index']
  #allocation1 [shape = 'u32[144,128]{1,0:T(1,128)}', space=vmem, size = 0x12000, scoped, tag = 'internal scratch']
  %s0 = inlined_call_operand.vmem [shape: f32[2], index: 0, kind: input, shape index: {}]
  %s1 = inlined_call_operand.vmem [shape: f32[2,4,256], index: 1, kind: input, shape index: {}]
  %s2 = inlined_call_operand.vmem [shape: f32[2,4,256], index: 2, kind: input, shape index: {}]
  %s3 = inlined_call_operand.vmem [shape: f32[2,4,256], index: 3, kind: input, shape index: {}]
  %s4 = inlined_call_operand.vmem [shape: f32[9,4,4], index: 4, kind: input, shape index: {}]
  %s5 = inlined_call_operand.vmem [shape: f32[4,1], index: 5, kind: input, shape index: {}]
  %s6 = inlined_call_operand.vmem [shape: f32[9,4,4], index: 6, kind: input, shape index: {}]
  %s7 = inlined_call_operand.vmem [shape: f32[4,1], index: 7, kind: input, shape index: {}]
  %s8 = inlined_call_operand.hbm [shape: f32[2,4,256], index: 8, kind: output, shape index: {}]
  %s9 = sld [smem:[#allocation0]]
  $region69: #{tpu_custom_call.1} parent=0
    _
  %s11 = ssub.s32 1, %s9
  %s12 = scalar_select 0, %s11, %s9
  $region1: #{tpu_custom_call.1} parent=0
    #allocation2 [shape = 'u8[512]{0}', space=smem, size = 0x200, scoped, tag = 'input window, operand 0, single buffered']
    #allocation3 [shape = 's32[2]{0}', space=sflag, size = 0x8, scoped, tag = 'scoped memory for tpu_custom_call.1']
    #allocation4 [shape = 's32[2]{0}', space=sflag, size = 0x8, scoped, tag = 'scoped memory for tpu_custom_call.1']
    #allocation5 [shape = 'u8[4096]{0}', space=vmem, size = 0x1000, scoped, tag = 'output window, operand 0']
    %13 = vsyncpa [#allocation4], 0
    %14 = vsyncpa [#allocation3], 0
    %s15 = scalar_lea.sflag [#allocation3], 1
    %16 = vsyncpa %s15, 0
    loop: start=0, step=1, limit=6
    $region2: #{tpu_custom_call.1} parent=1 // loop_pre_header
      _
    $region3: #{tpu_custom_call.1} parent=1 // loop_header
      %s18 = sphi 0, %s22
      %p19 = scmp.ge.s32.totalorder %s18, 6
      %s25 = sphi 0, %s37
      %s26 = sphi 0, %s33
      %s27 = sphi 0, %s25
      %s28 = sphi 0, %s26
      %s29 = sphi 0, %s27
      %s30 = sphi 0, %s28
      %s38 = sphi 0, %s38
      %s40 = sphi 0, %s38
      %s41 = sphi 0, %s40
      %s55 = sphi 0, %s41
      %s69 = sphi 0, %s71
      %s72 = sphi 0, %s69
      %s73 = sphi 0, %s72
      %s89 = sphi 0, %s73
      %s97 = sphi 0, %s99
      %s100 = sphi 0, %s97
      %s101 = sphi 0, %s100
      %s117 = sphi 0, %s101
      %s131 = sphi 0, %s133
      %s134 = sphi 0, %s131
      %s135 = sphi 0, %s134
      %s151 = sphi 0, %s135
      %s155 = sphi 0, %s155
      %s157 = sphi 0, %s155
      %s158 = sphi 0, %s157
      %s172 = sphi 0, %s158
      %s176 = sphi 0, %s176
      %s178 = sphi 0, %s176
      %s179 = sphi 0, %s178
      %s193 = sphi 0, %s179
      %s197 = sphi 0, %s197
      %s199 = sphi 0, %s197
      %s200 = sphi 0, %s199
      %s214 = sphi 0, %s200
      %s218 = sphi 0, %s218
      %s220 = sphi 0, %s218
      %s221 = sphi 0, %s220
      %s235 = sphi 0, %s221
      %s243 = sphi 0, %s245
      %s246 = sphi 0, %s243
      %s247 = sphi 0, %s246
      %s263 = sphi 0, %s247
    $region4: #{tpu_custom_call.1} parent=1 // loop_header_branch
      %21 = sbr.rel (%p19) target = $region8
    $region5: #{tpu_custom_call.1} parent=1 // loop_body
      %s23 = ssub.s32 %s18, 1
      %s24 = ssub.s32 %s18, 2
      %s31 = sadd.s32 1, %s26
      %p32 = scmp.ge.s32.totalorder %s31, 2
      %s33 = scalar_select %p32, 0, %s31
      %s34 = sadd.s32 1, %s25
      %s35 = scalar_select %p32, %s34, %s25
      %p36 = scmp.ge.s32.totalorder %s35, 2
      %s37 = scalar_select %p36, 0, %s35
      %s39 = sadd.s32 %s38, 1
      %p42 = scmp.eq.s32.totalorder %s18, 3
      %p43 = scmp.ne.s32.totalorder %s38, %s40
      %p44 = scmp.eq.s32.totalorder %s18, 0
      %p45 = por %p43, %p44
      %p46 = scmp.ne.s32.totalorder %s38, %s40
      %p47 = scmp.eq.s32.totalorder %s23, 3
      %p48 = por %p46, %p47
      %p49 = scmp.ne.s32.totalorder %s40, %s41
      %p50 = scmp.eq.s32.totalorder %s23, 0
      %p51 = por %p49, %p50
      %p52 = scmp.ne.s32.totalorder %s40, %s41
      %p53 = scmp.eq.s32.totalorder %s24, 3
      %p54 = por %p52, %p53
      %p56 = scmp.ne.s32.totalorder %s41, %s55
      %p57 = scmp.eq.s32.totalorder %s24, 0
      %p58 = por %p56, %p57
      %s59 = ssub.s32 %s26, 1
      %p60 = scmp.gt.s32.totalorder %s59, 0
      %s61 = scalar_select %p60, %s59, 0
      %s62 = ssub.s32 %s33, 1
      %p63 = scmp.gt.s32.totalorder %s62, 0
      %s64 = scalar_select %p63, %s62, 0
      %s65 = ssub.s32 %s25, %s37
      %s66 = ssub.s32 %s61, %s64
      %s67 = sor.u32 %s65, %s66
      %p68 = scmp.eq.s32.totalorder %s67, 0
      %s70 = sadd.s32 %s69, 1
      %s71 = scalar_select %p68, %s69, %s70
      %p74 = pneg %p68
      %p75 = scmp.eq.s32.totalorder %s18, 3
      %p76 = por %p74, %p75
      %p77 = scmp.ne.s32.totalorder %s69, %s72
      %p78 = scmp.eq.s32.totalorder %s18, 0
      %p79 = por %p77, %p78
      %p80 = scmp.ne.s32.totalorder %s69, %s72
      %p81 = scmp.eq.s32.totalorder %s23, 3
      %p82 = por %p80, %p81
      %p83 = scmp.ne.s32.totalorder %s72, %s73
      %p84 = scmp.eq.s32.totalorder %s23, 0
      %p85 = por %p83, %p84
      %p86 = scmp.ne.s32.totalorder %s72, %s73
      %p87 = scmp.eq.s32.totalorder %s24, 3
      %p88 = por %p86, %p87
      %p90 = scmp.ne.s32.totalorder %s73, %s89
      %p91 = scmp.eq.s32.totalorder %s24, 0
      %p92 = por %p90, %p91
      %s93 = ssub.s32 %s25, %s37
      %s94 = ssub.s32 %s26, %s33
      %s95 = sor.u32 %s93, %s94
      %p96 = scmp.eq.s32.totalorder %s95, 0
      %s98 = sadd.s32 %s97, 1
      %s99 = scalar_select %p96, %s97, %s98
      %p102 = pneg %p96
      %p103 = scmp.eq.s32.totalorder %s18, 3
      %p104 = por %p102, %p103
      %p105 = scmp.ne.s32.totalorder %s97, %s100
      %p106 = scmp.eq.s32.totalorder %s18, 0
      %p107 = por %p105, %p106
      %p108 = scmp.ne.s32.totalorder %s97, %s100
      %p109 = scmp.eq.s32.totalorder %s23, 3
      %p110 = por %p108, %p109
      %p111 = scmp.ne.s32.totalorder %s100, %s101
      %p112 = scmp.eq.s32.totalorder %s23, 0
      %p113 = por %p111, %p112
      %p114 = scmp.ne.s32.totalorder %s100, %s101
      %p115 = scmp.eq.s32.totalorder %s24, 3
      %p116 = por %p114, %p115
      %p118 = scmp.ne.s32.totalorder %s101, %s117
      %p119 = scmp.eq.s32.totalorder %s24, 0
      %p120 = por %p118, %p119
      %s121 = sadd.s32 %s26, 1
      %p122 = scmp.lt.s32.totalorder %s121, 1
      %s123 = scalar_select %p122, %s121, 1
      %s124 = sadd.s32 %s33, 1
      %p125 = scmp.lt.s32.totalorder %s124, 1
      %s126 = scalar_select %p125, %s124, 1
      %s127 = ssub.s32 %s25, %s37
      %s128 = ssub.s32 %s123, %s126
      %s129 = sor.u32 %s127, %s128
      %p130 = scmp.eq.s32.totalorder %s129, 0
      %s132 = sadd.s32 %s131, 1
      %s133 = scalar_select %p130, %s131, %s132
      %p136 = pneg %p130
      %p137 = scmp.eq.s32.totalorder %s18, 3
      %p138 = por %p136, %p137
      %p139 = scmp.ne.s32.totalorder %s131, %s134
      %p140 = scmp.eq.s32.totalorder %s18, 0
      %p141 = por %p139, %p140
      %p142 = scmp.ne.s32.totalorder %s131, %s134
      %p143 = scmp.eq.s32.totalorder %s23, 3
      %p144 = por %p142, %p143
      %p145 = scmp.ne.s32.totalorder %s134, %s135
      %p146 = scmp.eq.s32.totalorder %s23, 0
      %p147 = por %p145, %p146
      %p148 = scmp.ne.s32.totalorder %s134, %s135
      %p149 = scmp.eq.s32.totalorder %s24, 3
      %p150 = por %p148, %p149
      %p152 = scmp.ne.s32.totalorder %s135, %s151
      %p153 = scmp.eq.s32.totalorder %s24, 0
      %p154 = por %p152, %p153
      %s156 = sadd.s32 %s155, 1
      %p159 = scmp.eq.s32.totalorder %s18, 3
      %p160 = scmp.ne.s32.totalorder %s155, %s157
      %p161 = scmp.eq.s32.totalorder %s18, 0
      %p162 = por %p160, %p161
      %p163 = scmp.ne.s32.totalorder %s155, %s157
      %p164 = scmp.eq.s32.totalorder %s23, 3
      %p165 = por %p163, %p164
      %p166 = scmp.ne.s32.totalorder %s157, %s158
      %p167 = scmp.eq.s32.totalorder %s23, 0
      %p168 = por %p166, %p167
      %p169 = scmp.ne.s32.totalorder %s157, %s158
      %p170 = scmp.eq.s32.totalorder %s24, 3
      %p171 = por %p169, %p170
      %p173 = scmp.ne.s32.totalorder %s158, %s172
      %p174 = scmp.eq.s32.totalorder %s24, 0
      %p175 = por %p173, %p174
      %s177 = sadd.s32 %s176, 1
      %p180 = scmp.eq.s32.totalorder %s18, 3
      %p181 = scmp.ne.s32.totalorder %s176, %s178
      %p182 = scmp.eq.s32.totalorder %s18, 0
      %p183 = por %p181, %p182
      %p184 = scmp.ne.s32.totalorder %s176, %s178
      %p185 = scmp.eq.s32.totalorder %s23, 3
      %p186 = por %p184, %p185
      %p187 = scmp.ne.s32.totalorder %s178, %s179
      %p188 = scmp.eq.s32.totalorder %s23, 0
      %p189 = por %p187, %p188
      %p190 = scmp.ne.s32.totalorder %s178, %s179
      %p191 = scmp.eq.s32.totalorder %s24, 3
      %p192 = por %p190, %p191
      %p194 = scmp.ne.s32.totalorder %s179, %s193
      %p195 = scmp.eq.s32.totalorder %s24, 0
      %p196 = por %p194, %p195
      %s198 = sadd.s32 %s197, 1
      %p201 = scmp.eq.s32.totalorder %s18, 3
      %p202 = scmp.ne.s32.totalorder %s197, %s199
      %p203 = scmp.eq.s32.totalorder %s18, 0
      %p204 = por %p202, %p203
      %p205 = scmp.ne.s32.totalorder %s197, %s199
      %p206 = scmp.eq.s32.totalorder %s23, 3
      %p207 = por %p205, %p206
      %p208 = scmp.ne.s32.totalorder %s199, %s200
      %p209 = scmp.eq.s32.totalorder %s23, 0
      %p210 = por %p208, %p209
      %p211 = scmp.ne.s32.totalorder %s199, %s200
      %p212 = scmp.eq.s32.totalorder %s24, 3
      %p213 = por %p211, %p212
      %p215 = scmp.ne.s32.totalorder %s200, %s214
      %p216 = scmp.eq.s32.totalorder %s24, 0
      %p217 = por %p215, %p216
      %s219 = sadd.s32 %s218, 1
      %p222 = scmp.eq.s32.totalorder %s18, 3
      %p223 = scmp.ne.s32.totalorder %s218, %s220
      %p224 = scmp.eq.s32.totalorder %s18, 0
      %p225 = por %p223, %p224
      %p226 = scmp.ne.s32.totalorder %s218, %s220
      %p227 = scmp.eq.s32.totalorder %s23, 3
      %p228 = por %p226, %p227
      %p229 = scmp.ne.s32.totalorder %s220, %s221
      %p230 = scmp.eq.s32.totalorder %s23, 0
      %p231 = por %p229, %p230
      %p232 = scmp.ne.s32.totalorder %s220, %s221
      %p233 = scmp.eq.s32.totalorder %s24, 3
      %p234 = por %p232, %p233
      %p236 = scmp.ne.s32.totalorder %s221, %s235
      %p237 = scmp.eq.s32.totalorder %s24, 0
      %p238 = por %p236, %p237
      %s239 = ssub.s32 %s25, %s37
      %s240 = ssub.s32 %s26, %s33
      %s241 = sor.u32 %s239, %s240
      %p242 = scmp.eq.s32.totalorder %s241, 0
      %s244 = sadd.s32 %s243, 1
      %s245 = scalar_select %p242, %s243, %s244
      %p248 = pneg %p242
      %p249 = scmp.eq.s32.totalorder %s18, 3
      %p250 = por %p248, %p249
      %p251 = scmp.ne.s32.totalorder %s243, %s246
      %p252 = scmp.eq.s32.totalorder %s18, 0
      %p253 = por %p251, %p252
      %p254 = scmp.ne.s32.totalorder %s243, %s246
      %p255 = scmp.eq.s32.totalorder %s23, 3
      %p256 = por %p254, %p255
      %p257 = scmp.ne.s32.totalorder %s246, %s247
      %p258 = scmp.eq.s32.totalorder %s23, 0
      %p259 = por %p257, %p258
      %p260 = scmp.ne.s32.totalorder %s246, %s247
      %p261 = scmp.eq.s32.totalorder %s24, 3
      %p262 = por %p260, %p261
      %p264 = scmp.ne.s32.totalorder %s247, %s263
      %p265 = scmp.eq.s32.totalorder %s24, 0
      %p266 = por %p264, %p265
      %p267 = scmp.le.s32.totalorder 1, %s18
      %p268 = scmp.lt.s32.totalorder %s18, 5
      %p269 = pnand %p267, %p268
      %p270 = pneg %p269
      // Predicated region
      $region9: #{tpu_custom_call.1} parent=5 // pred_check
        _
      $region10: #{tpu_custom_call.1} parent=5 // pred_check_branch
        %272 = sbr.rel (%p269) target = $region12
      $region11: #{tpu_custom_call.1} parent=5 // pred_region
        %s273 = ssub.s32 %s18, 1
        // Predicated region
        $region13: #{tpu_custom_call.1} parent=11 // pred_check
          %p274 = pneg %p51
        $region14: #{tpu_custom_call.1} parent=11 // pred_check_branch
          %276 = sbr.rel (%p274) target = $region16
        $region15: #{tpu_custom_call.1} parent=11 // pred_region
          %s278 = ssub.s32 16, 16
          %279 = vsyncadd [#allocation4], %s278
          %s281 = sshll.u32 %s0, 4
          %s282 = int_to_ptr.vmem [resolvable:$true] %s281
          %284 = dma.vmem_to_smem %s282, 16, [#allocation2], [#allocation4]
        $region16: #{tpu_custom_call.1} parent=11 // pred_fallthru
          _
        // Predicated region
        $region17: #{tpu_custom_call.1} parent=11 // pred_check
          %p285 = pneg %p168
        $region18: #{tpu_custom_call.1} parent=11 // pred_check_branch
          %287 = sbr.rel (%p285) target = $region20
        $region19: #{tpu_custom_call.1} parent=11 // pred_region
          _
        $region20: #{tpu_custom_call.1} parent=11 // pred_fallthru
          _
        // Predicated region
        $region21: #{tpu_custom_call.1} parent=11 // pred_check
          %p288 = pneg %p189
        $region22: #{tpu_custom_call.1} parent=11 // pred_check_branch
          %290 = sbr.rel (%p288) target = $region24
        $region23: #{tpu_custom_call.1} parent=11 // pred_region
          _
        $region24: #{tpu_custom_call.1} parent=11 // pred_fallthru
          _
        // Predicated region
        $region25: #{tpu_custom_call.1} parent=11 // pred_check
          %p291 = pneg %p210
        $region26: #{tpu_custom_call.1} parent=11 // pred_check_branch
          %293 = sbr.rel (%p291) target = $region28
        $region27: #{tpu_custom_call.1} parent=11 // pred_region
          _
        $region28: #{tpu_custom_call.1} parent=11 // pred_fallthru
          _
        // Predicated region
        $region29: #{tpu_custom_call.1} parent=11 // pred_check
          %p294 = pneg %p231
        $region30: #{tpu_custom_call.1} parent=11 // pred_check_branch
          %296 = sbr.rel (%p294) target = $region32
        $region31: #{tpu_custom_call.1} parent=11 // pred_region
          _
        $region32: #{tpu_custom_call.1} parent=11 // pred_fallthru
          _
      $region12: #{tpu_custom_call.1} parent=5 // pred_fallthru
        _
      %p297 = scmp.lt.s32.totalorder %s18, 4
      // Predicated region
      $region33: #{tpu_custom_call.1} parent=5 // pred_check
        %p298 = pneg %p297
      $region34: #{tpu_custom_call.1} parent=5 // pred_check_branch
        %300 = sbr.rel (%p298) target = $region36
      $region35: #{tpu_custom_call.1} parent=5 // pred_region
        // Predicated region
        $region37: #{tpu_custom_call.1} parent=35 // pred_check
          %p301 = pneg %p79
        $region38: #{tpu_custom_call.1} parent=35 // pred_check_branch
          %303 = sbr.rel (%p301) target = $region40
        $region39: #{tpu_custom_call.1} parent=35 // pred_region
          %s304 = ssub.s32 %s26, 1
          %p305 = scmp.gt.s32.totalorder %s304, 0
          %s306 = scalar_select %p305, %s304, 0
          %p307 = scmp.lt.s32.totalorder %s25, 1
          %s308 = scalar_select %p307, %s25, 1
          %p309 = scmp.lt.s32.totalorder %s306, 1
          %s310 = scalar_select %p309, %s306, 1
          %s311 = smul.addr %s308, 2
          %s312 = sadd.s32 %s310, %s311
          %s313 = smul.addr %s312, 4
          %s314 = scalar_lea.vmem %s1, %s313
          %s315 = ssub.s32 %s26, 1
          %p316 = scmp.gt.s32.totalorder %s315, 0
          %s317 = scalar_select %p316, %s315, 0
        $region40: #{tpu_custom_call.1} parent=35 // pred_fallthru
          _
        // Predicated region
        $region41: #{tpu_custom_call.1} parent=35 // pred_check
          %p318 = pneg %p107
        $region42: #{tpu_custom_call.1} parent=35 // pred_check_branch
          %320 = sbr.rel (%p318) target = $region44
        $region43: #{tpu_custom_call.1} parent=35 // pred_region
          %p321 = scmp.lt.s32.totalorder %s25, 1
          %s322 = scalar_select %p321, %s25, 1
          %p323 = scmp.lt.s32.totalorder %s26, 1
          %s324 = scalar_select %p323, %s26, 1
          %s325 = smul.addr %s322, 2
          %s326 = sadd.s32 %s324, %s325
          %s327 = smul.addr %s326, 4
          %s328 = scalar_lea.vmem %s2, %s327
        $region44: #{tpu_custom_call.1} parent=35 // pred_fallthru
          _
        // Predicated region
        $region45: #{tpu_custom_call.1} parent=35 // pred_check
          %p329 = pneg %p141
        $region46: #{tpu_custom_call.1} parent=35 // pred_check_branch
          %331 = sbr.rel (%p329) target = $region48
        $region47: #{tpu_custom_call.1} parent=35 // pred_region
          %s332 = sadd.s32 %s26, 1
          %p333 = scmp.lt.s32.totalorder %s332, 1
          %s334 = scalar_select %p333, %s332, 1
          %p335 = scmp.lt.s32.totalorder %s25, 1
          %s336 = scalar_select %p335, %s25, 1
          %p337 = scmp.lt.s32.totalorder %s334, 1
          %s338 = scalar_select %p337, %s334, 1
          %s339 = smul.addr %s336, 2
          %s340 = sadd.s32 %s338, %s339
          %s341 = smul.addr %s340, 4
          %s342 = scalar_lea.vmem %s3, %s341
          %s343 = sadd.s32 %s26, 1
          %p344 = scmp.lt.s32.totalorder %s343, 1
          %s345 = scalar_select %p344, %s343, 1
        $region48: #{tpu_custom_call.1} parent=35 // pred_fallthru
          _
      $region36: #{tpu_custom_call.1} parent=5 // pred_fallthru
        _
      %p346 = scmp.le.s32.totalorder 1, %s18
      %p347 = scmp.lt.s32.totalorder %s18, 5
      %p348 = pnand %p346, %p347
      %p349 = pneg %p348
      // Predicated region
      $region49: #{tpu_custom_call.1} parent=5 // pred_check
        _
      $region50: #{tpu_custom_call.1} parent=5 // pred_check_branch
        %351 = sbr.rel (%p348) target = $region52
      $region51: #{tpu_custom_call.1} parent=5 // pred_region
        %s352 = ssub.s32 %s18, 1
        // Predicated region
        $region53: #{tpu_custom_call.1} parent=51 // pred_check
          %p353 = pneg %p51
        $region54: #{tpu_custom_call.1} parent=51 // pred_check_branch
          %355 = sbr.rel (%p353) target = $region56
        $region55: #{tpu_custom_call.1} parent=51 // pred_region
          %356 = dma.done [#allocation4], 16
        $region56: #{tpu_custom_call.1} parent=51 // pred_fallthru
          _
        %357 = sfence
        %p358 = pneg %p51
        %p359 = pneg %p48
        %s360 = ssub.s32 %s28, 1
        %p361 = scmp.gt.s32.totalorder %s360, 0
        %s362 = scalar_select %p361, %s360, 0
        %p363 = scmp.lt.s32.totalorder %s27, 1
        %s364 = scalar_select %p363, %s27, 1
        %p365 = scmp.lt.s32.totalorder %s362, 1
        %s366 = scalar_select %p365, %s362, 1
        %s367 = smul.addr %s364, 2
        %s368 = sadd.s32 %s366, %s367
        %s369 = smul.addr %s368, 4
        %s370 = scalar_lea.vmem %s1, %s369
        %p371 = pneg %p85
        %p372 = pneg %p82
        %p373 = scmp.lt.s32.totalorder %s27, 1
        %s374 = scalar_select %p373, %s27, 1
        %p375 = scmp.lt.s32.totalorder %s28, 1
        %s376 = scalar_select %p375, %s28, 1
        %s377 = smul.addr %s374, 2
        %s378 = sadd.s32 %s376, %s377
        %s379 = smul.addr %s378, 4
        %s380 = scalar_lea.vmem %s2, %s379
        %p381 = pneg %p113
        %p382 = pneg %p110
        %s383 = sadd.s32 %s28, 1
        %p384 = scmp.lt.s32.totalorder %s383, 1
        %s385 = scalar_select %p384, %s383, 1
        %p386 = scmp.lt.s32.totalorder %s27, 1
        %s387 = scalar_select %p386, %s27, 1
        %p388 = scmp.lt.s32.totalorder %s385, 1
        %s389 = scalar_select %p388, %s385, 1
        %s390 = smul.addr %s387, 2
        %s391 = sadd.s32 %s389, %s390
        %s392 = smul.addr %s391, 4
        %s393 = scalar_lea.vmem %s3, %s392
        %p394 = pneg %p147
        %p395 = pneg %p144
        %p396 = pneg %p168
        %p397 = pneg %p165
        %p398 = pneg %p189
        %p399 = pneg %p186
        %p400 = pneg %p210
        %p401 = pneg %p207
        %p402 = pneg %p231
        %p403 = pneg %p228
        %p404 = pneg %p259
        %p405 = pneg %p256
        %s406 = sand.u32 %s246, 1
        %s407 = scalar_lea.sflag [#allocation3], %s406
        %s408 = sand.u32 %s246, 1
        %s409 = smul.addr %s408, 4
        %s410 = scalar_lea.vmem [#allocation5], %s409
        %s411 = ssub.s32 %s28, 1
        %p412 = scmp.gt.s32.totalorder %s411, 0
        %s413 = scalar_select %p412, %s411, 0
        %p414 = scmp.lt.s32.totalorder %s27, 1
        %s415 = scalar_select %p414, %s27, 1
        %p416 = scmp.lt.s32.totalorder %s413, 1
        %s417 = scalar_select %p416, %s413, 1
        %s418 = smul.addr %s415, 2
        %s419 = sadd.s32 %s417, %s418
        %s420 = smul.addr %s419, 4
        %s421 = scalar_lea.vmem %s1, %s420
        %s422 = ssub.s32 %s28, 1
        %p423 = scmp.gt.s32.totalorder %s422, 0
        %s424 = scalar_select %p423, %s422, 0
        %p425 = scmp.lt.s32.totalorder %s27, 1
        %s426 = scalar_select %p425, %s27, 1
        %p427 = scmp.lt.s32.totalorder %s28, 1
        %s428 = scalar_select %p427, %s28, 1
        %s429 = smul.addr %s426, 2
        %s430 = sadd.s32 %s428, %s429
        %s431 = smul.addr %s430, 4
        %s432 = scalar_lea.vmem %s2, %s431
        %s433 = sadd.s32 %s28, 1
        %p434 = scmp.lt.s32.totalorder %s433, 1
        %s435 = scalar_select %p434, %s433, 1
        %p436 = scmp.lt.s32.totalorder %s27, 1
        %s437 = scalar_select %p436, %s27, 1
        %p438 = scmp.lt.s32.totalorder %s435, 1
        %s439 = scalar_select %p438, %s435, 1
        %s440 = smul.addr %s437, 2
        %s441 = sadd.s32 %s439, %s440
        %s442 = smul.addr %s441, 4
        %s443 = scalar_lea.vmem %s3, %s442
        %s444 = sadd.s32 %s28, 1
        %p445 = scmp.lt.s32.totalorder %s444, 1
        %s446 = scalar_select %p445, %s444, 1
        %s447 = smul.u32 %s28, 128
        %s448 = ssub.s32 %s447, 64
        %v449 = vld [vmem:[%s421] sm:$0xf]
        %v450 = vld [vmem:[%s432] sm:$0xf]
        %v451 = vld [vmem:[%s443] sm:$0xf]
        %453 = vrot.lane.b32.xlu0 %v449, 64
        %v454 = vpop.permute.xlu0 %453
        %457 = vrot.lane.b32.xlu0 %v450, 64
        %v458 = vpop.permute.xlu0 %457
        %461 = vrot.lane.b32.xlu0 %v451, 64
        %v462 = vpop.permute.xlu0 %461
        %vm464 = vcmask 523264
        %v465 = vsel %vm464, %v454, %v458
        %v466 = vsel %vm464, %v458, %v462
        %v467 = vlaneseq
        %v468 = vand.u32 %v467, 127
        %v469 = vadd.s32 %v468, 128
        %v470 = vstv %s448
        %v471 = vadd.s32 %v470, %v468
        %v472 = vadd.s32 %v470, %v469
        %vm473 = vcmp.ge.s32.totalorder %v471, 0
        %vm474 = vcmp.ge.s32.totalorder %v472, 0
        %vm475 = vcmp.lt.s32.totalorder %v471, 256
        %vm476 = vcmp.lt.s32.totalorder %v472, 256
        %vm477 = vmand %vm473, %vm475
        %vm478 = vmand %vm474, %vm476
        %v479 = vsel %vm477, 1, 0
        %v480 = vsel %vm478, 1, 0
        %vm481 = vcmp.eq.s32.totalorder %v479, 1
        %vm482 = vcmp.eq.s32.totalorder %v480, 1
        %v483 = vsel %vm481, %v465, 0.0
        %v484 = vsel %vm482, %v466, 0.0
        %s485 = sadd.s32 %s447, 4294967279
        %v486 = vstv %s485
        %v487 = vadd.s32 %v486, %v468
        %v488 = vadd.s32 %v486, %v469
        %vm489 = vcmp.ge.s32.totalorder %v487, 0
        %vm490 = vcmp.ge.s32.totalorder %v488, 0
        %vm491 = vcmp.lt.s32.totalorder %v487, 256
        %vm492 = vcmp.lt.s32.totalorder %v488, 256
        %vm493 = vmand %vm489, %vm491
        %vm494 = vmand %vm490, %vm492
        %v495 = vadd.s32 %v468, 15
        %v496 = vadd.s32 %v469, 15
        %vm497 = vcmp.lt.s32.totalorder %v495, 0
        %v498 = vsub.s32 0, %v495
        %v499 = vsel %vm497, %v498, %v495
        %v500 = vshrl.u32 %v499, 4
        %v501 = vand.u32 %v499, 15
        %v502 = vsub.s32 0, %v501
        %v503 = vsel %vm497, %v502, %v501
        %vm504 = vcmp.lt.s32.totalorder %v496, 0
        %v505 = vsub.s32 0, %v496
        %v506 = vsel %vm504, %v505, %v496
        %v507 = vshrl.u32 %v506, 4
        %v508 = vand.u32 %v506, 15
        %v509 = vsub.s32 0, %v508
        %v510 = vsel %vm504, %v509, %v508
        %vm511 = vcmp.ne.s32.totalorder %v503, 0
        %vm512 = vcmp.ne.s32.totalorder %v510, 0
        %vm513 = vcmp.lt.s32.totalorder %v503, 0
        %vm514 = vcmp.lt.s32.totalorder %v510, 0
        %vm515 = vmand %vm513, %vm511
        %vm516 = vmand %vm514, %vm512
        %v517 = vadd.s32 %v503, 16
        %v518 = vadd.s32 %v510, 16
        %v519 = vsel %vm515, %v517, %v503
        %v520 = vsel %vm516, %v518, %v510
        %vm521 = vcmp.lt.s32.totalorder %v468, 0
        %v522 = vsub.s32 0, %v468
        %v523 = vsel %vm521, %v522, %v468
        %v524 = vshrl.u32 %v523, 4
        %v525 = vand.u32 %v523, 15
        %v526 = vsub.s32 0, %v525
        %v527 = vsel %vm521, %v526, %v525
        %vm528 = vcmp.ne.s32.totalorder %v527, 0
        %vm529 = vcmp.lt.s32.totalorder %v527, 0
        %vm530 = vmand %vm529, %vm528
        %v531 = vadd.s32 %v527, 16
        %v532 = vsel %vm530, %v531, %v527
        %vm533 = vcmp.ge.s32.totalorder %v519, 1
        %vm534 = vcmp.ge.s32.totalorder %v520, 1
        %v535 = vsel %vm533, 1, 0
        %v536 = vsel %vm534, 1, 0
        %vm537 = vcmp.eq.s32.totalorder %v535, 1
        %vm538 = vcmp.eq.s32.totalorder %v536, 1
        %541 = vrot.lane.b32.xlu0 %v483, 98
        %v542 = vpop.permute.xlu0 %541
        %543 = vrot.lane.b32.xlu0 %v484, 98
        %v544 = vpop.permute.xlu0 %543
        %vm545 = vcmask 801792
        %v546 = vsel %vm545, %v542, %v544
        %v549 = vsel %vm537, %v546, 0.0
        %v550 = vsel %vm538, %v544, 0.0
        %v551 = vld [vmem:[%s4] sm:$0xf]
        %s552 = scalar_lea.vmem %s4, 4
        %v553 = vld [vmem:[%s552] sm:$0xf]
        %554 = vrot.lane.b32.xlu0 %v483, 97
        %v555 = vpop.permute.xlu0 %554
        %556 = vrot.lane.b32.xlu0 %v484, 97
        %v557 = vpop.permute.xlu0 %556
        %vm558 = vcmask 793600
        %v559 = vsel %vm558, %v555, %v557
        %vm560 = vcmask 31744
        %v562 = vsel %vm560, %v553, 0
        %vm564 = vcmask 1043456
        %v565 = vsel %vm564, %v559, 0
        %v567 = vsel %vm564, %v557, 0
        %569 = vmatprep.subr.mxu0 %v567
        %570 = vmatpush1.msra.mxu0 %v565
        %571 = vmatprep.subr.mxu0 0.0
        %572 = vmatpush1.msra.mxu0 0.0
        %573 = vmatprep.subr.mxu0 0.0
        %574 = vmatpush1.msra.mxu0 0.0
        %575 = vmatprep.subr.mxu0 0.0
        %576 = vmatpush1.msra.mxu0 0.0
        %577 = vmatprep.subr.mxu0 0.0
        %578 = vmatpush1.msra.mxu0 0.0
        %579 = vmatprep.subr.mxu0 0.0
        %580 = vmatpush1.msra.mxu0 0.0
        %581 = vmatprep.subr.mxu0 0.0
        %582 = vmatpush1.msra.mxu0 0.0
        %583 = vmatprep.subr.mxu0 0.0
        %584 = vmatpush1.msra.mxu0 0.0
        %585 = vmatprep.subr.mxu0 0.0
        %586 = vmatpush1.msra.mxu0 0.0
        %587 = vmatprep.subr.mxu0 0.0
        %588 = vmatpush1.msra.mxu0 0.0
        %589 = vmatprep.subr.mxu0 0.0
        %590 = vmatpush1.msra.mxu0 0.0
        %591 = vmatprep.subr.mxu0 0.0
        %592 = vmatpush1.msra.mxu0 0.0
        %593 = vmatprep.subr.mxu0 0.0
        %594 = vmatpush1.msra.mxu0 0.0
        %595 = vmatprep.subr.mxu0 0.0
        %596 = vmatpush1.msra.mxu0 0.0
        %597 = vmatprep.subr.mxu0 0.0
        %598 = vmatpush1.msra.mxu0 0.0
        %599 = vmatprep.subr.mxu0 0.0
        %600 = vmatpush1.msra.mxu0 0.0
        %601 = vmatprep.subr.mxu0 0.0
        %602 = vmatpush1.msra.mxu0 0.0
        %603 = vmatprep.subr.mxu0 0.0
        %604 = vmatpush1.msra.mxu0 0.0
        %605 = vmatprep.subr.mxu0 0.0
        %606 = vmatpush1.msra.mxu0 0.0
        %607 = vmatprep.subr.mxu0 0.0
        %608 = vmatpush1.msra.mxu0 0.0
        %609 = vmatprep.subr.mxu0 0.0
        %610 = vmatpush1.msra.mxu0 0.0
        %611 = vmatprep.subr.mxu0 0.0
        %612 = vmatpush1.msra.mxu0 0.0
        %613 = vmatprep.subr.mxu0 0.0
        %614 = vmatpush1.msra.mxu0 0.0
        %615 = vmatprep.subr.mxu0 0.0
        %616 = vmatpush1.msra.mxu0 0.0
        %617 = vmatprep.subr.mxu0 0.0
        %618 = vmatpush1.msra.mxu0 0.0
        %619 = vmatprep.subr.mxu0 0.0
        %620 = vmatpush1.msra.mxu0 0.0
        %621 = vmatprep.subr.mxu0 0.0
        %622 = vmatpush1.msra.mxu0 0.0
        %623 = vmatprep.subr.mxu0 0.0
        %624 = vmatpush1.msra.mxu0 0.0
        %625 = vmatprep.subr.mxu0 0.0
        %626 = vmatpush1.msra.mxu0 0.0
        %627 = vmatprep.subr.mxu0 0.0
        %628 = vmatpush1.msra.mxu0 0.0
        %629 = vmatprep.subr.mxu0 0.0
        %630 = vmatpush1.msra.mxu0 0.0
        %631 = vmatprep.subr.mxu0 0.0
        %632 = vmatpush1.msra.mxu0 0.0
        %633 = vmatprep.mubr.f32.mxu0 0.0
        %634 = vmatmul.mubr.f32.gmra.mrb[0].mxu0 %v562
        %v635 = vpop.f32.mrb[0].mxu0
        %v636 = vadd.f32 0.0, %v635
        %v637 = vpop.f32.mrb[0].mxu0
        %v638 = vadd.f32 0.0, %v637
        %639 = vdwg.mxu0
        %v641 = vsel %vm560, %v551, 0
        %v644 = vsel %vm564, %v549, 0
        %v647 = vsel %vm564, %v550, 0
        %649 = vmatprep.subr.mxu0 %v647
        %650 = vmatpush1.msra.mxu0 %v644
        %651 = vmatprep.subr.mxu0 0.0
        %652 = vmatpush1.msra.mxu0 0.0
        %653 = vmatprep.subr.mxu0 0.0
        %654 = vmatpush1.msra.mxu0 0.0
        %655 = vmatprep.subr.mxu0 0.0
        %656 = vmatpush1.msra.mxu0 0.0
        %657 = vmatprep.subr.mxu0 0.0
        %658 = vmatpush1.msra.mxu0 0.0
        %659 = vmatprep.subr.mxu0 0.0
        %660 = vmatpush1.msra.mxu0 0.0
        %661 = vmatprep.subr.mxu0 0.0
        %662 = vmatpush1.msra.mxu0 0.0
        %663 = vmatprep.subr.mxu0 0.0
        %664 = vmatpush1.msra.mxu0 0.0
        %665 = vmatprep.subr.mxu0 0.0
        %666 = vmatpush1.msra.mxu0 0.0
        %667 = vmatprep.subr.mxu0 0.0
        %668 = vmatpush1.msra.mxu0 0.0
        %669 = vmatprep.subr.mxu0 0.0
        %670 = vmatpush1.msra.mxu0 0.0
        %671 = vmatprep.subr.mxu0 0.0
        %672 = vmatpush1.msra.mxu0 0.0
        %673 = vmatprep.subr.mxu0 0.0
        %674 = vmatpush1.msra.mxu0 0.0
        %675 = vmatprep.subr.mxu0 0.0
        %676 = vmatpush1.msra.mxu0 0.0
        %677 = vmatprep.subr.mxu0 0.0
        %678 = vmatpush1.msra.mxu0 0.0
        %679 = vmatprep.subr.mxu0 0.0
        %680 = vmatpush1.msra.mxu0 0.0
        %681 = vmatprep.subr.mxu0 0.0
        %682 = vmatpush1.msra.mxu0 0.0
        %683 = vmatprep.subr.mxu0 0.0
        %684 = vmatpush1.msra.mxu0 0.0
        %685 = vmatprep.subr.mxu0 0.0
        %686 = vmatpush1.msra.mxu0 0.0
        %687 = vmatprep.subr.mxu0 0.0
        %688 = vmatpush1.msra.mxu0 0.0
        %689 = vmatprep.subr.mxu0 0.0
        %690 = vmatpush1.msra.mxu0 0.0
        %691 = vmatprep.subr.mxu0 0.0
        %692 = vmatpush1.msra.mxu0 0.0
        %693 = vmatprep.subr.mxu0 0.0
        %694 = vmatpush1.msra.mxu0 0.0
        %695 = vmatprep.subr.mxu0 0.0
        %696 = vmatpush1.msra.mxu0 0.0
        %697 = vmatprep.subr.mxu0 0.0
        %698 = vmatpush1.msra.mxu0 0.0
        %699 = vmatprep.subr.mxu0 0.0
        %700 = vmatpush1.msra.mxu0 0.0
        %701 = vmatprep.subr.mxu0 0.0
        %702 = vmatpush1.msra.mxu0 0.0
        %703 = vmatprep.subr.mxu0 0.0
        %704 = vmatpush1.msra.mxu0 0.0
        %705 = vmatprep.subr.mxu0 0.0
        %706 = vmatpush1.msra.mxu0 0.0
        %707 = vmatprep.subr.mxu0 0.0
        %708 = vmatpush1.msra.mxu0 0.0
        %709 = vmatprep.subr.mxu0 0.0
        %710 = vmatpush1.msra.mxu0 0.0
        %711 = vmatprep.subr.mxu0 0.0
        %712 = vmatpush1.msra.mxu0 0.0
        %713 = vmatprep.mubr.f32.mxu0 0.0
        %714 = vmatmul.mubr.f32.gmra.mrb[0].mxu0 %v641
        %v715 = vpop.f32.mrb[0].mxu0
        %v716 = vadd.f32 %v636, %v715
        %v717 = vpop.f32.mrb[0].mxu0
        %v718 = vadd.f32 %v638, %v717
        %719 = vdwg.mxu0
        %vm720 = vcmp.le.s32.totalorder %v519, 14
        %vm721 = vcmp.le.s32.totalorder %v520, 14
        %v722 = vsel %vm720, 1, 0
        %v723 = vsel %vm721, 1, 0
        %vm724 = vcmp.eq.s32.totalorder %v722, 1
        %vm725 = vcmp.eq.s32.totalorder %v723, 1
        %726 = vrot.lane.b32.xlu0 %v483, 96
        %v727 = vpop.permute.xlu0 %726
        %728 = vrot.lane.b32.xlu0 %v484, 96
        %v729 = vpop.permute.xlu0 %728
        %vm730 = vcmask 785408
        %v731 = vsel %vm730, %v727, %v729
        %v734 = vsel %vm724, %v731, 0.0
        %v735 = vsel %vm725, %v729, 0.0
        %s736 = scalar_lea.vmem %s4, 8
        %v737 = vld [vmem:[%s736] sm:$0xf]
        %v739 = vsel %vm560, %v737, 0
        %v742 = vsel %vm564, %v734, 0
        %v745 = vsel %vm564, %v735, 0
        %747 = vmatprep.subr.mxu0 %v745
        %748 = vmatpush1.msra.mxu0 %v742
        %749 = vmatprep.subr.mxu0 0.0
        %750 = vmatpush1.msra.mxu0 0.0
        %751 = vmatprep.subr.mxu0 0.0
        %752 = vmatpush1.msra.mxu0 0.0
        %753 = vmatprep.subr.mxu0 0.0
        %754 = vmatpush1.msra.mxu0 0.0
        %755 = vmatprep.subr.mxu0 0.0
        %756 = vmatpush1.msra.mxu0 0.0
        %757 = vmatprep.subr.mxu0 0.0
        %758 = vmatpush1.msra.mxu0 0.0
        %759 = vmatprep.subr.mxu0 0.0
        %760 = vmatpush1.msra.mxu0 0.0
        %761 = vmatprep.subr.mxu0 0.0
        %762 = vmatpush1.msra.mxu0 0.0
        %763 = vmatprep.subr.mxu0 0.0
        %764 = vmatpush1.msra.mxu0 0.0
        %765 = vmatprep.subr.mxu0 0.0
        %766 = vmatpush1.msra.mxu0 0.0
        %767 = vmatprep.subr.mxu0 0.0
        %768 = vmatpush1.msra.mxu0 0.0
        %769 = vmatprep.subr.mxu0 0.0
        %770 = vmatpush1.msra.mxu0 0.0
        %771 = vmatprep.subr.mxu0 0.0
        %772 = vmatpush1.msra.mxu0 0.0
        %773 = vmatprep.subr.mxu0 0.0
        %774 = vmatpush1.msra.mxu0 0.0
        %775 = vmatprep.subr.mxu0 0.0
        %776 = vmatpush1.msra.mxu0 0.0
        %777 = vmatprep.subr.mxu0 0.0
        %778 = vmatpush1.msra.mxu0 0.0
        %779 = vmatprep.subr.mxu0 0.0
        %780 = vmatpush1.msra.mxu0 0.0
        %781 = vmatprep.subr.mxu0 0.0
        %782 = vmatpush1.msra.mxu0 0.0
        %783 = vmatprep.subr.mxu0 0.0
        %784 = vmatpush1.msra.mxu0 0.0
        %785 = vmatprep.subr.mxu0 0.0
        %786 = vmatpush1.msra.mxu0 0.0
        %787 = vmatprep.subr.mxu0 0.0
        %788 = vmatpush1.msra.mxu0 0.0
        %789 = vmatprep.subr.mxu0 0.0
        %790 = vmatpush1.msra.mxu0 0.0
        %791 = vmatprep.subr.mxu0 0.0
        %792 = vmatpush1.msra.mxu0 0.0
        %793 = vmatprep.subr.mxu0 0.0
        %794 = vmatpush1.msra.mxu0 0.0
        %795 = vmatprep.subr.mxu0 0.0
        %796 = vmatpush1.msra.mxu0 0.0
        %797 = vmatprep.subr.mxu0 0.0
        %798 = vmatpush1.msra.mxu0 0.0
        %799 = vmatprep.subr.mxu0 0.0
        %800 = vmatpush1.msra.mxu0 0.0
        %801 = vmatprep.subr.mxu0 0.0
        %802 = vmatpush1.msra.mxu0 0.0
        %803 = vmatprep.subr.mxu0 0.0
        %804 = vmatpush1.msra.mxu0 0.0
        %805 = vmatprep.subr.mxu0 0.0
        %806 = vmatpush1.msra.mxu0 0.0
        %807 = vmatprep.subr.mxu0 0.0
        %808 = vmatpush1.msra.mxu0 0.0
        %809 = vmatprep.subr.mxu0 0.0
        %810 = vmatpush1.msra.mxu0 0.0
        %811 = vmatprep.mubr.f32.mxu0 0.0
        %812 = vmatmul.mubr.f32.gmra.mrb[0].mxu0 %v739
        %v813 = vpop.f32.mrb[0].mxu0
        %v814 = vadd.f32 0.0, %v813
        %v815 = vpop.f32.mrb[0].mxu0
        %v816 = vadd.f32 0.0, %v815
        %817 = vdwg.mxu0
        %v818 = vadd.f32 %v716, %v814
        %v819 = vadd.f32 %v718, %v816
        %820 = vrot.lane.b32.xlu0 %v483, 82
        %v821 = vpop.permute.xlu0 %820
        %822 = vrot.lane.b32.xlu0 %v484, 82
        %v823 = vpop.permute.xlu0 %822
        %vm824 = vcmask 670720
        %v825 = vsel %vm824, %v821, %v823
        %v828 = vsel %vm537, %v825, 0.0
        %v829 = vsel %vm538, %v823, 0.0
        %s830 = scalar_lea.vmem %s4, 12
        %v831 = vld [vmem:[%s830] sm:$0xf]
        %v833 = vsel %vm560, %v831, 0
        %v836 = vsel %vm564, %v828, 0
        %v839 = vsel %vm564, %v829, 0
        %841 = vmatprep.subr.mxu0 %v839
        %842 = vmatpush1.msra.mxu0 %v836
        %843 = vmatprep.subr.mxu0 0.0
        %844 = vmatpush1.msra.mxu0 0.0
        %845 = vmatprep.subr.mxu0 0.0
        %846 = vmatpush1.msra.mxu0 0.0
        %847 = vmatprep.subr.mxu0 0.0
        %848 = vmatpush1.msra.mxu0 0.0
        %849 = vmatprep.subr.mxu0 0.0
        %850 = vmatpush1.msra.mxu0 0.0
        %851 = vmatprep.subr.mxu0 0.0
        %852 = vmatpush1.msra.mxu0 0.0
        %853 = vmatprep.subr.mxu0 0.0
        %854 = vmatpush1.msra.mxu0 0.0
        %855 = vmatprep.subr.mxu0 0.0
        %856 = vmatpush1.msra.mxu0 0.0
        %857 = vmatprep.subr.mxu0 0.0
        %858 = vmatpush1.msra.mxu0 0.0
        %859 = vmatprep.subr.mxu0 0.0
        %860 = vmatpush1.msra.mxu0 0.0
        %861 = vmatprep.subr.mxu0 0.0
        %862 = vmatpush1.msra.mxu0 0.0
        %863 = vmatprep.subr.mxu0 0.0
        %864 = vmatpush1.msra.mxu0 0.0
        %865 = vmatprep.subr.mxu0 0.0
        %866 = vmatpush1.msra.mxu0 0.0
        %867 = vmatprep.subr.mxu0 0.0
        %868 = vmatpush1.msra.mxu0 0.0
        %869 = vmatprep.subr.mxu0 0.0
        %870 = vmatpush1.msra.mxu0 0.0
        %871 = vmatprep.subr.mxu0 0.0
        %872 = vmatpush1.msra.mxu0 0.0
        %873 = vmatprep.subr.mxu0 0.0
        %874 = vmatpush1.msra.mxu0 0.0
        %875 = vmatprep.subr.mxu0 0.0
        %876 = vmatpush1.msra.mxu0 0.0
        %877 = vmatprep.subr.mxu0 0.0
        %878 = vmatpush1.msra.mxu0 0.0
        %879 = vmatprep.subr.mxu0 0.0
        %880 = vmatpush1.msra.mxu0 0.0
        %881 = vmatprep.subr.mxu0 0.0
        %882 = vmatpush1.msra.mxu0 0.0
        %883 = vmatprep.subr.mxu0 0.0
        %884 = vmatpush1.msra.mxu0 0.0
        %885 = vmatprep.subr.mxu0 0.0
        %886 = vmatpush1.msra.mxu0 0.0
        %887 = vmatprep.subr.mxu0 0.0
        %888 = vmatpush1.msra.mxu0 0.0
        %889 = vmatprep.subr.mxu0 0.0
        %890 = vmatpush1.msra.mxu0 0.0
        %891 = vmatprep.subr.mxu0 0.0
        %892 = vmatpush1.msra.mxu0 0.0
        %893 = vmatprep.subr.mxu0 0.0
        %894 = vmatpush1.msra.mxu0 0.0
        %895 = vmatprep.subr.mxu0 0.0
        %896 = vmatpush1.msra.mxu0 0.0
        %897 = vmatprep.subr.mxu0 0.0
        %898 = vmatpush1.msra.mxu0 0.0
        %899 = vmatprep.subr.mxu0 0.0
        %900 = vmatpush1.msra.mxu0 0.0
        %901 = vmatprep.subr.mxu0 0.0
        %902 = vmatpush1.msra.mxu0 0.0
        %903 = vmatprep.subr.mxu0 0.0
        %904 = vmatpush1.msra.mxu0 0.0
        %905 = vmatprep.mubr.f32.mxu0 0.0
        %906 = vmatmul.mubr.f32.gmra.mrb[0].mxu0 %v833
        %v907 = vpop.f32.mrb[0].mxu0
        %v908 = vadd.f32 0.0, %v907
        %v909 = vpop.f32.mrb[0].mxu0
        %v910 = vadd.f32 0.0, %v909
        %911 = vdwg.mxu0
        %v912 = vadd.f32 %v818, %v908
        %v913 = vadd.f32 %v819, %v910
        %s914 = scalar_lea.vmem %s4, 16
        %v915 = vld [vmem:[%s914] sm:$0xf]
        %916 = vrot.lane.b32.xlu0 %v483, 81
        %v917 = vpop.permute.xlu0 %916
        %918 = vrot.lane.b32.xlu0 %v484, 81
        %v919 = vpop.permute.xlu0 %918
        %vm920 = vcmask 662528
        %v921 = vsel %vm920, %v917, %v919
        %v923 = vsel %vm560, %v915, 0
        %v925 = vsel %vm564, %v921, 0
        %v927 = vsel %vm564, %v919, 0
        %929 = vmatprep.subr.mxu0 %v927
        %930 = vmatpush1.msra.mxu0 %v925
        %931 = vmatprep.subr.mxu0 0.0
        %932 = vmatpush1.msra.mxu0 0.0
        %933 = vmatprep.subr.mxu0 0.0
        %934 = vmatpush1.msra.mxu0 0.0
        %935 = vmatprep.subr.mxu0 0.0
        %936 = vmatpush1.msra.mxu0 0.0
        %937 = vmatprep.subr.mxu0 0.0
        %938 = vmatpush1.msra.mxu0 0.0
        %939 = vmatprep.subr.mxu0 0.0
        %940 = vmatpush1.msra.mxu0 0.0
        %941 = vmatprep.subr.mxu0 0.0
        %942 = vmatpush1.msra.mxu0 0.0
        %943 = vmatprep.subr.mxu0 0.0
        %944 = vmatpush1.msra.mxu0 0.0
        %945 = vmatprep.subr.mxu0 0.0
        %946 = vmatpush1.msra.mxu0 0.0
        %947 = vmatprep.subr.mxu0 0.0
        %948 = vmatpush1.msra.mxu0 0.0
        %949 = vmatprep.subr.mxu0 0.0
        %950 = vmatpush1.msra.mxu0 0.0
        %951 = vmatprep.subr.mxu0 0.0
        %952 = vmatpush1.msra.mxu0 0.0
        %953 = vmatprep.subr.mxu0 0.0
        %954 = vmatpush1.msra.mxu0 0.0
        %955 = vmatprep.subr.mxu0 0.0
        %956 = vmatpush1.msra.mxu0 0.0
        %957 = vmatprep.subr.mxu0 0.0
        %958 = vmatpush1.msra.mxu0 0.0
        %959 = vmatprep.subr.mxu0 0.0
        %960 = vmatpush1.msra.mxu0 0.0
        %961 = vmatprep.subr.mxu0 0.0
        %962 = vmatpush1.msra.mxu0 0.0
        %963 = vmatprep.subr.mxu0 0.0
        %964 = vmatpush1.msra.mxu0 0.0
        %965 = vmatprep.subr.mxu0 0.0
        %966 = vmatpush1.msra.mxu0 0.0
        %967 = vmatprep.subr.mxu0 0.0
        %968 = vmatpush1.msra.mxu0 0.0
        %969 = vmatprep.subr.mxu0 0.0
        %970 = vmatpush1.msra.mxu0 0.0
        %971 = vmatprep.subr.mxu0 0.0
        %972 = vmatpush1.msra.mxu0 0.0
        %973 = vmatprep.subr.mxu0 0.0
        %974 = vmatpush1.msra.mxu0 0.0
        %975 = vmatprep.subr.mxu0 0.0
        %976 = vmatpush1.msra.mxu0 0.0
        %977 = vmatprep.subr.mxu0 0.0
        %978 = vmatpush1.msra.mxu0 0.0
        %979 = vmatprep.subr.mxu0 0.0
        %980 = vmatpush1.msra.mxu0 0.0
        %981 = vmatprep.subr.mxu0 0.0
        %982 = vmatpush1.msra.mxu0 0.0
        %983 = vmatprep.subr.mxu0 0.0
        %984 = vmatpush1.msra.mxu0 0.0
        %985 = vmatprep.subr.mxu0 0.0
        %986 = vmatpush1.msra.mxu0 0.0
        %987 = vmatprep.subr.mxu0 0.0
        %988 = vmatpush1.msra.mxu0 0.0
        %989 = vmatprep.subr.mxu0 0.0
        %990 = vmatpush1.msra.mxu0 0.0
        %991 = vmatprep.subr.mxu0 0.0
        %992 = vmatpush1.msra.mxu0 0.0
        %993 = vmatprep.mubr.f32.mxu0 0.0
        %994 = vmatmul.mubr.f32.gmra.mrb[0].mxu0 %v923
        %v995 = vpop.f32.mrb[0].mxu0
        %v996 = vadd.f32 0.0, %v995
        %v997 = vpop.f32.mrb[0].mxu0
        %v998 = vadd.f32 0.0, %v997
        %999 = vdwg.mxu0
        %v1000 = vadd.f32 %v912, %v996
        %v1001 = vadd.f32 %v913, %v998
        %1002 = vrot.lane.b32.xlu0 %v483, 80
        %v1003 = vpop.permute.xlu0 %1002
        %1004 = vrot.lane.b32.xlu0 %v484, 80
        %v1005 = vpop.permute.xlu0 %1004
        %vm1006 = vcmask 654336
        %v1007 = vsel %vm1006, %v1003, %v1005
        %v1010 = vsel %vm724, %v1007, 0.0
        %v1011 = vsel %vm725, %v1005, 0.0
        %s1012 = scalar_lea.vmem %s4, 20
        %v1013 = vld [vmem:[%s1012] sm:$0xf]
        %v1015 = vsel %vm560, %v1013, 0
        %v1018 = vsel %vm564, %v1010, 0
        %v1021 = vsel %vm564, %v1011, 0
        %1023 = vmatprep.subr.mxu0 %v1021
        %1024 = vmatpush1.msra.mxu0 %v1018
        %1025 = vmatprep.subr.mxu0 0.0
        %1026 = vmatpush1.msra.mxu0 0.0
        %1027 = vmatprep.subr.mxu0 0.0
        %1028 = vmatpush1.msra.mxu0 0.0
        %1029 = vmatprep.subr.mxu0 0.0
        %1030 = vmatpush1.msra.mxu0 0.0
        %1031 = vmatprep.subr.mxu0 0.0
        %1032 = vmatpush1.msra.mxu0 0.0
        %1033 = vmatprep.subr.mxu0 0.0
        %1034 = vmatpush1.msra.mxu0 0.0
        %1035 = vmatprep.subr.mxu0 0.0
        %1036 = vmatpush1.msra.mxu0 0.0
        %1037 = vmatprep.subr.mxu0 0.0
        %1038 = vmatpush1.msra.mxu0 0.0
        %1039 = vmatprep.subr.mxu0 0.0
        %1040 = vmatpush1.msra.mxu0 0.0
        %1041 = vmatprep.subr.mxu0 0.0
        %1042 = vmatpush1.msra.mxu0 0.0
        %1043 = vmatprep.subr.mxu0 0.0
        %1044 = vmatpush1.msra.mxu0 0.0
        %1045 = vmatprep.subr.mxu0 0.0
        %1046 = vmatpush1.msra.mxu0 0.0
        %1047 = vmatprep.subr.mxu0 0.0
        %1048 = vmatpush1.msra.mxu0 0.0
        %1049 = vmatprep.subr.mxu0 0.0
        %1050 = vmatpush1.msra.mxu0 0.0
        %1051 = vmatprep.subr.mxu0 0.0
        %1052 = vmatpush1.msra.mxu0 0.0
        %1053 = vmatprep.subr.mxu0 0.0
        %1054 = vmatpush1.msra.mxu0 0.0
        %1055 = vmatprep.subr.mxu0 0.0
        %1056 = vmatpush1.msra.mxu0 0.0
        %1057 = vmatprep.subr.mxu0 0.0
        %1058 = vmatpush1.msra.mxu0 0.0
        %1059 = vmatprep.subr.mxu0 0.0
        %1060 = vmatpush1.msra.mxu0 0.0
        %1061 = vmatprep.subr.mxu0 0.0
        %1062 = vmatpush1.msra.mxu0 0.0
        %1063 = vmatprep.subr.mxu0 0.0
        %1064 = vmatpush1.msra.mxu0 0.0
        %1065 = vmatprep.subr.mxu0 0.0
        %1066 = vmatpush1.msra.mxu0 0.0
        %1067 = vmatprep.subr.mxu0 0.0
        %1068 = vmatpush1.msra.mxu0 0.0
        %1069 = vmatprep.subr.mxu0 0.0
        %1070 = vmatpush1.msra.mxu0 0.0
        %1071 = vmatprep.subr.mxu0 0.0
        %1072 = vmatpush1.msra.mxu0 0.0
        %1073 = vmatprep.subr.mxu0 0.0
        %1074 = vmatpush1.msra.mxu0 0.0
        %1075 = vmatprep.subr.mxu0 0.0
        %1076 = vmatpush1.msra.mxu0 0.0
        %1077 = vmatprep.subr.mxu0 0.0
        %1078 = vmatpush1.msra.mxu0 0.0
        %1079 = vmatprep.subr.mxu0 0.0
        %1080 = vmatpush1.msra.mxu0 0.0
        %1081 = vmatprep.subr.mxu0 0.0
        %1082 = vmatpush1.msra.mxu0 0.0
        %1083 = vmatprep.subr.mxu0 0.0
        %1084 = vmatpush1.msra.mxu0 0.0
        %1085 = vmatprep.subr.mxu0 0.0
        %1086 = vmatpush1.msra.mxu0 0.0
        %1087 = vmatprep.mubr.f32.mxu0 0.0
        %1088 = vmatmul.mubr.f32.gmra.mrb[0].mxu0 %v1015
        %v1089 = vpop.f32.mrb[0].mxu0
        %v1090 = vadd.f32 0.0, %v1089
        %v1091 = vpop.f32.mrb[0].mxu0
        %v1092 = vadd.f32 0.0, %v1091
        %1093 = vdwg.mxu0
        %v1094 = vadd.f32 %v1000, %v1090
        %v1095 = vadd.f32 %v1001, %v1092
        %1096 = vrot.lane.b32.xlu0 %v483, 66
        %v1097 = vpop.permute.xlu0 %1096
        %1098 = vrot.lane.b32.xlu0 %v484, 66
        %v1099 = vpop.permute.xlu0 %1098
        %vm1100 = vcmask 539648
        %v1101 = vsel %vm1100, %v1097, %v1099
        %v1104 = vsel %vm537, %v1101, 0.0
        %v1105 = vsel %vm538, %v1099, 0.0
        %s1106 = scalar_lea.vmem %s4, 24
        %v1107 = vld [vmem:[%s1106] sm:$0xf]
        %v1109 = vsel %vm560, %v1107, 0
        %v1112 = vsel %vm564, %v1104, 0
        %v1115 = vsel %vm564, %v1105, 0
        %1117 = vmatprep.subr.mxu0 %v1115
        %1118 = vmatpush1.msra.mxu0 %v1112
        %1119 = vmatprep.subr.mxu0 0.0
        %1120 = vmatpush1.msra.mxu0 0.0
        %1121 = vmatprep.subr.mxu0 0.0
        %1122 = vmatpush1.msra.mxu0 0.0
        %1123 = vmatprep.subr.mxu0 0.0
        %1124 = vmatpush1.msra.mxu0 0.0
        %1125 = vmatprep.subr.mxu0 0.0
        %1126 = vmatpush1.msra.mxu0 0.0
        %1127 = vmatprep.subr.mxu0 0.0
        %1128 = vmatpush1.msra.mxu0 0.0
        %1129 = vmatprep.subr.mxu0 0.0
        %1130 = vmatpush1.msra.mxu0 0.0
        %1131 = vmatprep.subr.mxu0 0.0
        %1132 = vmatpush1.msra.mxu0 0.0
        %1133 = vmatprep.subr.mxu0 0.0
        %1134 = vmatpush1.msra.mxu0 0.0
        %1135 = vmatprep.subr.mxu0 0.0
        %1136 = vmatpush1.msra.mxu0 0.0
        %1137 = vmatprep.subr.mxu0 0.0
        %1138 = vmatpush1.msra.mxu0 0.0
        %1139 = vmatprep.subr.mxu0 0.0
        %1140 = vmatpush1.msra.mxu0 0.0
        %1141 = vmatprep.subr.mxu0 0.0
        %1142 = vmatpush1.msra.mxu0 0.0
        %1143 = vmatprep.subr.mxu0 0.0
        %1144 = vmatpush1.msra.mxu0 0.0
        %1145 = vmatprep.subr.mxu0 0.0
        %1146 = vmatpush1.msra.mxu0 0.0
        %1147 = vmatprep.subr.mxu0 0.0
        %1148 = vmatpush1.msra.mxu0 0.0
        %1149 = vmatprep.subr.mxu0 0.0
        %1150 = vmatpush1.msra.mxu0 0.0
        %1151 = vmatprep.subr.mxu0 0.0
        %1152 = vmatpush1.msra.mxu0 0.0
        %1153 = vmatprep.subr.mxu0 0.0
        %1154 = vmatpush1.msra.mxu0 0.0
        %1155 = vmatprep.subr.mxu0 0.0
        %1156 = vmatpush1.msra.mxu0 0.0
        %1157 = vmatprep.subr.mxu0 0.0
        %1158 = vmatpush1.msra.mxu0 0.0
        %1159 = vmatprep.subr.mxu0 0.0
        %1160 = vmatpush1.msra.mxu0 0.0
        %1161 = vmatprep.subr.mxu0 0.0
        %1162 = vmatpush1.msra.mxu0 0.0
        %1163 = vmatprep.subr.mxu0 0.0
        %1164 = vmatpush1.msra.mxu0 0.0
        %1165 = vmatprep.subr.mxu0 0.0
        %1166 = vmatpush1.msra.mxu0 0.0
        %1167 = vmatprep.subr.mxu0 0.0
        %1168 = vmatpush1.msra.mxu0 0.0
        %1169 = vmatprep.subr.mxu0 0.0
        %1170 = vmatpush1.msra.mxu0 0.0
        %1171 = vmatprep.subr.mxu0 0.0
        %1172 = vmatpush1.msra.mxu0 0.0
        %1173 = vmatprep.subr.mxu0 0.0
        %1174 = vmatpush1.msra.mxu0 0.0
        %1175 = vmatprep.subr.mxu0 0.0
        %1176 = vmatpush1.msra.mxu0 0.0
        %1177 = vmatprep.subr.mxu0 0.0
        %1178 = vmatpush1.msra.mxu0 0.0
        %1179 = vmatprep.subr.mxu0 0.0
        %1180 = vmatpush1.msra.mxu0 0.0
        %1181 = vmatprep.mubr.f32.mxu0 0.0
        %1182 = vmatmul.mubr.f32.gmra.mrb[0].mxu0 %v1109
        %v1183 = vpop.f32.mrb[0].mxu0
        %v1184 = vadd.f32 0.0, %v1183
        %v1185 = vpop.f32.mrb[0].mxu0
        %v1186 = vadd.f32 0.0, %v1185
        %1187 = vdwg.mxu0
        %v1188 = vadd.f32 %v1094, %v1184
        %v1189 = vadd.f32 %v1095, %v1186
        %s1190 = scalar_lea.vmem %s4, 28
        %v1191 = vld [vmem:[%s1190] sm:$0xf]
        %1192 = vrot.lane.b32.xlu0 %v483, 65
        %v1193 = vpop.permute.xlu0 %1192
        %1194 = vrot.lane.b32.xlu0 %v484, 65
        %v1195 = vpop.permute.xlu0 %1194
        %vm1196 = vcmask 531456
        %v1197 = vsel %vm1196, %v1193, %v1195
        %v1199 = vsel %vm560, %v1191, 0
        %v1201 = vsel %vm564, %v1197, 0
        %v1203 = vsel %vm564, %v1195, 0
        %1205 = vmatprep.subr.mxu0 %v1203
        %1206 = vmatpush1.msra.mxu0 %v1201
        %1207 = vmatprep.subr.mxu0 0.0
        %1208 = vmatpush1.msra.mxu0 0.0
        %1209 = vmatprep.subr.mxu0 0.0
        %1210 = vmatpush1.msra.mxu0 0.0
        %1211 = vmatprep.subr.mxu0 0.0
        %1212 = vmatpush1.msra.mxu0 0.0
        %1213 = vmatprep.subr.mxu0 0.0
        %1214 = vmatpush1.msra.mxu0 0.0
        %1215 = vmatprep.subr.mxu0 0.0
        %1216 = vmatpush1.msra.mxu0 0.0
        %1217 = vmatprep.subr.mxu0 0.0
        %1218 = vmatpush1.msra.mxu0 0.0
        %1219 = vmatprep.subr.mxu0 0.0
        %1220 = vmatpush1.msra.mxu0 0.0
        %1221 = vmatprep.subr.mxu0 0.0
        %1222 = vmatpush1.msra.mxu0 0.0
        %1223 = vmatprep.subr.mxu0 0.0
        %1224 = vmatpush1.msra.mxu0 0.0
        %1225 = vmatprep.subr.mxu0 0.0
        %1226 = vmatpush1.msra.mxu0 0.0
        %1227 = vmatprep.subr.mxu0 0.0
        %1228 = vmatpush1.msra.mxu0 0.0
        %1229 = vmatprep.subr.mxu0 0.0
        %1230 = vmatpush1.msra.mxu0 0.0
        %1231 = vmatprep.subr.mxu0 0.0
        %1232 = vmatpush1.msra.mxu0 0.0
        %1233 = vmatprep.subr.mxu0 0.0
        %1234 = vmatpush1.msra.mxu0 0.0
        %1235 = vmatprep.subr.mxu0 0.0
        %1236 = vmatpush1.msra.mxu0 0.0
        %1237 = vmatprep.subr.mxu0 0.0
        %1238 = vmatpush1.msra.mxu0 0.0
        %1239 = vmatprep.subr.mxu0 0.0
        %1240 = vmatpush1.msra.mxu0 0.0
        %1241 = vmatprep.subr.mxu0 0.0
        %1242 = vmatpush1.msra.mxu0 0.0
        %1243 = vmatprep.subr.mxu0 0.0
        %1244 = vmatpush1.msra.mxu0 0.0
        %1245 = vmatprep.subr.mxu0 0.0
        %1246 = vmatpush1.msra.mxu0 0.0
        %1247 = vmatprep.subr.mxu0 0.0
        %1248 = vmatpush1.msra.mxu0 0.0
        %1249 = vmatprep.subr.mxu0 0.0
        %1250 = vmatpush1.msra.mxu0 0.0
        %1251 = vmatprep.subr.mxu0 0.0
        %1252 = vmatpush1.msra.mxu0 0.0
        %1253 = vmatprep.subr.mxu0 0.0
        %1254 = vmatpush1.msra.mxu0 0.0
        %1255 = vmatprep.subr.mxu0 0.0
        %1256 = vmatpush1.msra.mxu0 0.0
        %1257 = vmatprep.subr.mxu0 0.0
        %1258 = vmatpush1.msra.mxu0 0.0
        %1259 = vmatprep.subr.mxu0 0.0
        %1260 = vmatpush1.msra.mxu0 0.0
        %1261 = vmatprep.subr.mxu0 0.0
        %1262 = vmatpush1.msra.mxu0 0.0
        %1263 = vmatprep.subr.mxu0 0.0
        %1264 = vmatpush1.msra.mxu0 0.0
        %1265 = vmatprep.subr.mxu0 0.0
        %1266 = vmatpush1.msra.mxu0 0.0
        %1267 = vmatprep.subr.mxu0 0.0
        %1268 = vmatpush1.msra.mxu0 0.0
        %1269 = vmatprep.mubr.f32.mxu0 0.0
        %1270 = vmatmul.mubr.f32.gmra.mrb[0].mxu0 %v1199
        %v1271 = vpop.f32.mrb[0].mxu0
        %v1272 = vadd.f32 0.0, %v1271
        %v1273 = vpop.f32.mrb[0].mxu0
        %v1274 = vadd.f32 0.0, %v1273
        %1275 = vdwg.mxu0
        %v1276 = vadd.f32 %v1188, %v1272
        %v1277 = vadd.f32 %v1189, %v1274
        %1278 = vrot.lane.b32.xlu0 %v483, 64
        %v1279 = vpop.permute.xlu0 %1278
        %1280 = vrot.lane.b32.xlu0 %v484, 64
        %v1281 = vpop.permute.xlu0 %1280
        %v1282 = vsel %vm464, %v1279, %v1281
        %v1285 = vsel %vm724, %v1282, 0.0
        %v1286 = vsel %vm725, %v1281, 0.0
        %s1287 = scalar_lea.vmem %s4, 32
        %v1288 = vld [vmem:[%s1287] sm:$0xf]
        %v1290 = vsel %vm560, %v1288, 0
        %v1293 = vsel %vm564, %v1285, 0
        %v1296 = vsel %vm564, %v1286, 0
        %1298 = vmatprep.subr.mxu0 %v1296
        %1299 = vmatpush1.msra.mxu0 %v1293
        %1300 = vmatprep.subr.mxu0 0.0
        %1301 = vmatpush1.msra.mxu0 0.0
        %1302 = vmatprep.subr.mxu0 0.0
        %1303 = vmatpush1.msra.mxu0 0.0
        %1304 = vmatprep.subr.mxu0 0.0
        %1305 = vmatpush1.msra.mxu0 0.0
        %1306 = vmatprep.subr.mxu0 0.0
        %1307 = vmatpush1.msra.mxu0 0.0
        %1308 = vmatprep.subr.mxu0 0.0
        %1309 = vmatpush1.msra.mxu0 0.0
        %1310 = vmatprep.subr.mxu0 0.0
        %1311 = vmatpush1.msra.mxu0 0.0
        %1312 = vmatprep.subr.mxu0 0.0
        %1313 = vmatpush1.msra.mxu0 0.0
        %1314 = vmatprep.subr.mxu0 0.0
        %1315 = vmatpush1.msra.mxu0 0.0
        %1316 = vmatprep.subr.mxu0 0.0
        %1317 = vmatpush1.msra.mxu0 0.0
        %1318 = vmatprep.subr.mxu0 0.0
        %1319 = vmatpush1.msra.mxu0 0.0
        %1320 = vmatprep.subr.mxu0 0.0
        %1321 = vmatpush1.msra.mxu0 0.0
        %1322 = vmatprep.subr.mxu0 0.0
        %1323 = vmatpush1.msra.mxu0 0.0
        %1324 = vmatprep.subr.mxu0 0.0
        %1325 = vmatpush1.msra.mxu0 0.0
        %1326 = vmatprep.subr.mxu0 0.0
        %1327 = vmatpush1.msra.mxu0 0.0
        %1328 = vmatprep.subr.mxu0 0.0
        %1329 = vmatpush1.msra.mxu0 0.0
        %1330 = vmatprep.subr.mxu0 0.0
        %1331 = vmatpush1.msra.mxu0 0.0
        %1332 = vmatprep.subr.mxu0 0.0
        %1333 = vmatpush1.msra.mxu0 0.0
        %1334 = vmatprep.subr.mxu0 0.0
        %1335 = vmatpush1.msra.mxu0 0.0
        %1336 = vmatprep.subr.mxu0 0.0
        %1337 = vmatpush1.msra.mxu0 0.0
        %1338 = vmatprep.subr.mxu0 0.0
        %1339 = vmatpush1.msra.mxu0 0.0
        %1340 = vmatprep.subr.mxu0 0.0
        %1341 = vmatpush1.msra.mxu0 0.0
        %1342 = vmatprep.subr.mxu0 0.0
        %1343 = vmatpush1.msra.mxu0 0.0
        %1344 = vmatprep.subr.mxu0 0.0
        %1345 = vmatpush1.msra.mxu0 0.0
        %1346 = vmatprep.subr.mxu0 0.0
        %1347 = vmatpush1.msra.mxu0 0.0
        %1348 = vmatprep.subr.mxu0 0.0
        %1349 = vmatpush1.msra.mxu0 0.0
        %1350 = vmatprep.subr.mxu0 0.0
        %1351 = vmatpush1.msra.mxu0 0.0
        %1352 = vmatprep.subr.mxu0 0.0
        %1353 = vmatpush1.msra.mxu0 0.0
        %1354 = vmatprep.subr.mxu0 0.0
        %1355 = vmatpush1.msra.mxu0 0.0
        %1356 = vmatprep.subr.mxu0 0.0
        %1357 = vmatpush1.msra.mxu0 0.0
        %1358 = vmatprep.subr.mxu0 0.0
        %1359 = vmatpush1.msra.mxu0 0.0
        %1360 = vmatprep.subr.mxu0 0.0
        %1361 = vmatpush1.msra.mxu0 0.0
        %1362 = vmatprep.mubr.f32.mxu0 0.0
        %1363 = vmatmul.mubr.f32.gmra.mrb[0].mxu0 %v1290
        %v1364 = vpop.f32.mrb[0].mxu0
        %v1365 = vadd.f32 0.0, %v1364
        %v1366 = vpop.f32.mrb[0].mxu0
        %v1367 = vadd.f32 0.0, %v1366
        %1368 = vdwg.mxu0
        %v1369 = vadd.f32 %v1276, %v1365
        %v1370 = vadd.f32 %v1277, %v1367
        %v1371 = vld [vmem:[%s5] sm:$0xf]
        %1373 = vset.pattern.permute.xlu0 0
        %1374 = vperm.xlu0 %1373, %v1371
        %v1375 = vpop.permute.xlu0 %1374
        %v1377 = vadd.f32 %v1369, %v1375
        %v1378 = vadd.f32 %v1370, %v1375
        %v1379 = vmax.f32 %v1377, 0.0
        %v1380 = vmax.f32 %v1378, 0.0
        %v1381 = vsel %vm493, 1, 0
        %v1382 = vsel %vm494, 1, 0
        %vm1383 = vcmp.eq.s32.totalorder %v1381, 1
        %vm1384 = vcmp.eq.s32.totalorder %v1382, 1
        %v1385 = vsel %vm1383, %v1379, 0.0
        %v1386 = vsel %vm1384, %v1380, 0.0
        %vm1387 = vcmp.ge.s32.totalorder %v532, 1
        %v1388 = vsel %vm1387, 1, 0
        %vm1389 = vcmp.eq.s32.totalorder %v1388, 1
        %v1390 = vsel %vm1389, %v1385, 0.0
        %v1391 = vld [vmem:[%s6] sm:$0xf]
        %s1392 = scalar_lea.vmem %s6, 4
        %v1393 = vld [vmem:[%s1392] sm:$0xf]
        %1396 = vrot.lane.b32.xlu0 %v1385, 127
        %v1397 = vpop.permute.xlu0 %1396
        %1398 = vrot.lane.b32.xlu0 %v1386, 127
        %v1399 = vpop.permute.xlu0 %1398
        %vm1400 = vcmask 1039360
        %v1401 = vsel %vm1400, %v1397, %v1399
        %v1403 = vsel %vm560, %v1393, 0
        %v1405 = vsel %vm564, %v1401, 0
        %1407 = vmatprep.subr.mxu0 0.0
        %1408 = vmatpush1.msra.mxu0 %v1405
        %1409 = vmatprep.subr.mxu0 0.0
        %1410 = vmatpush1.msra.mxu0 0.0
        %1411 = vmatprep.subr.mxu0 0.0
        %1412 = vmatpush1.msra.mxu0 0.0
        %1413 = vmatprep.subr.mxu0 0.0
        %1414 = vmatpush1.msra.mxu0 0.0
        %1415 = vmatprep.subr.mxu0 0.0
        %1416 = vmatpush1.msra.mxu0 0.0
        %1417 = vmatprep.subr.mxu0 0.0
        %1418 = vmatpush1.msra.mxu0 0.0
        %1419 = vmatprep.subr.mxu0 0.0
        %1420 = vmatpush1.msra.mxu0 0.0
        %1421 = vmatprep.subr.mxu0 0.0
        %1422 = vmatpush1.msra.mxu0 0.0
        %1423 = vmatprep.subr.mxu0 0.0
        %1424 = vmatpush1.msra.mxu0 0.0
        %1425 = vmatprep.subr.mxu0 0.0
        %1426 = vmatpush1.msra.mxu0 0.0
        %1427 = vmatprep.subr.mxu0 0.0
        %1428 = vmatpush1.msra.mxu0 0.0
        %1429 = vmatprep.subr.mxu0 0.0
        %1430 = vmatpush1.msra.mxu0 0.0
        %1431 = vmatprep.subr.mxu0 0.0
        %1432 = vmatpush1.msra.mxu0 0.0
        %1433 = vmatprep.subr.mxu0 0.0
        %1434 = vmatpush1.msra.mxu0 0.0
        %1435 = vmatprep.subr.mxu0 0.0
        %1436 = vmatpush1.msra.mxu0 0.0
        %1437 = vmatprep.subr.mxu0 0.0
        %1438 = vmatpush1.msra.mxu0 0.0
        %1439 = vmatprep.subr.mxu0 0.0
        %1440 = vmatpush1.msra.mxu0 0.0
        %1441 = vmatprep.subr.mxu0 0.0
        %1442 = vmatpush1.msra.mxu0 0.0
        %1443 = vmatprep.subr.mxu0 0.0
        %1444 = vmatpush1.msra.mxu0 0.0
        %1445 = vmatprep.subr.mxu0 0.0
        %1446 = vmatpush1.msra.mxu0 0.0
        %1447 = vmatprep.subr.mxu0 0.0
        %1448 = vmatpush1.msra.mxu0 0.0
        %1449 = vmatprep.subr.mxu0 0.0
        %1450 = vmatpush1.msra.mxu0 0.0
        %1451 = vmatprep.subr.mxu0 0.0
        %1452 = vmatpush1.msra.mxu0 0.0
        %1453 = vmatprep.subr.mxu0 0.0
        %1454 = vmatpush1.msra.mxu0 0.0
        %1455 = vmatprep.subr.mxu0 0.0
        %1456 = vmatpush1.msra.mxu0 0.0
        %1457 = vmatprep.subr.mxu0 0.0
        %1458 = vmatpush1.msra.mxu0 0.0
        %1459 = vmatprep.subr.mxu0 0.0
        %1460 = vmatpush1.msra.mxu0 0.0
        %1461 = vmatprep.subr.mxu0 0.0
        %1462 = vmatpush1.msra.mxu0 0.0
        %1463 = vmatprep.subr.mxu0 0.0
        %1464 = vmatpush1.msra.mxu0 0.0
        %1465 = vmatprep.subr.mxu0 0.0
        %1466 = vmatpush1.msra.mxu0 0.0
        %1467 = vmatprep.subr.mxu0 0.0
        %1468 = vmatpush1.msra.mxu0 0.0
        %1469 = vmatprep.subr.mxu0 0.0
        %1470 = vmatpush1.msra.mxu0 0.0
        %1471 = vmatprep.mubr.f32.mxu0 0.0
        %1472 = vmatmul.mubr.f32.gmra.mrb[0].mxu0 %v1403
        %v1473 = vpop.f32.mrb[0].mxu0
        %v1474 = vadd.f32 0.0, %v1473
        %v1475 = vpop.f32.mrb[0].mxu0
        %1476 = vdwg.mxu0
        %v1478 = vsel %vm560, %v1391, 0
        %v1481 = vsel %vm564, %v1390, 0
        %1483 = vmatprep.subr.mxu0 0.0
        %1484 = vmatpush1.msra.mxu0 %v1481
        %1485 = vmatprep.subr.mxu0 0.0
        %1486 = vmatpush1.msra.mxu0 0.0
        %1487 = vmatprep.subr.mxu0 0.0
        %1488 = vmatpush1.msra.mxu0 0.0
        %1489 = vmatprep.subr.mxu0 0.0
        %1490 = vmatpush1.msra.mxu0 0.0
        %1491 = vmatprep.subr.mxu0 0.0
        %1492 = vmatpush1.msra.mxu0 0.0
        %1493 = vmatprep.subr.mxu0 0.0
        %1494 = vmatpush1.msra.mxu0 0.0
        %1495 = vmatprep.subr.mxu0 0.0
        %1496 = vmatpush1.msra.mxu0 0.0
        %1497 = vmatprep.subr.mxu0 0.0
        %1498 = vmatpush1.msra.mxu0 0.0
        %1499 = vmatprep.subr.mxu0 0.0
        %1500 = vmatpush1.msra.mxu0 0.0
        %1501 = vmatprep.subr.mxu0 0.0
        %1502 = vmatpush1.msra.mxu0 0.0
        %1503 = vmatprep.subr.mxu0 0.0
        %1504 = vmatpush1.msra.mxu0 0.0
        %1505 = vmatprep.subr.mxu0 0.0
        %1506 = vmatpush1.msra.mxu0 0.0
        %1507 = vmatprep.subr.mxu0 0.0
        %1508 = vmatpush1.msra.mxu0 0.0
        %1509 = vmatprep.subr.mxu0 0.0
        %1510 = vmatpush1.msra.mxu0 0.0
        %1511 = vmatprep.subr.mxu0 0.0
        %1512 = vmatpush1.msra.mxu0 0.0
        %1513 = vmatprep.subr.mxu0 0.0
        %1514 = vmatpush1.msra.mxu0 0.0
        %1515 = vmatprep.subr.mxu0 0.0
        %1516 = vmatpush1.msra.mxu0 0.0
        %1517 = vmatprep.subr.mxu0 0.0
        %1518 = vmatpush1.msra.mxu0 0.0
        %1519 = vmatprep.subr.mxu0 0.0
        %1520 = vmatpush1.msra.mxu0 0.0
        %1521 = vmatprep.subr.mxu0 0.0
        %1522 = vmatpush1.msra.mxu0 0.0
        %1523 = vmatprep.subr.mxu0 0.0
        %1524 = vmatpush1.msra.mxu0 0.0
        %1525 = vmatprep.subr.mxu0 0.0
        %1526 = vmatpush1.msra.mxu0 0.0
        %1527 = vmatprep.subr.mxu0 0.0
        %1528 = vmatpush1.msra.mxu0 0.0
        %1529 = vmatprep.subr.mxu0 0.0
        %1530 = vmatpush1.msra.mxu0 0.0
        %1531 = vmatprep.subr.mxu0 0.0
        %1532 = vmatpush1.msra.mxu0 0.0
        %1533 = vmatprep.subr.mxu0 0.0
        %1534 = vmatpush1.msra.mxu0 0.0
        %1535 = vmatprep.subr.mxu0 0.0
        %1536 = vmatpush1.msra.mxu0 0.0
        %1537 = vmatprep.subr.mxu0 0.0
        %1538 = vmatpush1.msra.mxu0 0.0
        %1539 = vmatprep.subr.mxu0 0.0
        %1540 = vmatpush1.msra.mxu0 0.0
        %1541 = vmatprep.subr.mxu0 0.0
        %1542 = vmatpush1.msra.mxu0 0.0
        %1543 = vmatprep.subr.mxu0 0.0
        %1544 = vmatpush1.msra.mxu0 0.0
        %1545 = vmatprep.subr.mxu0 0.0
        %1546 = vmatpush1.msra.mxu0 0.0
        %1547 = vmatprep.mubr.f32.mxu0 0.0
        %1548 = vmatmul.mubr.f32.gmra.mrb[0].mxu0 %v1478
        %v1549 = vpop.f32.mrb[0].mxu0
        %v1550 = vadd.f32 %v1474, %v1549
        %v1551 = vpop.f32.mrb[0].mxu0
        %1552 = vdwg.mxu0
        %vm1553 = vcmp.le.s32.totalorder %v532, 14
        %v1554 = vsel %vm1553, 1, 0
        %vm1555 = vcmp.eq.s32.totalorder %v1554, 1
        %1556 = vrot.lane.b32.xlu0 %v1385, 126
        %v1557 = vpop.permute.xlu0 %1556
        %1558 = vrot.lane.b32.xlu0 %v1386, 126
        %v1559 = vpop.permute.xlu0 %1558
        %vm1560 = vcmask 1031168
        %v1561 = vsel %vm1560, %v1557, %v1559
        %v1563 = vsel %vm1555, %v1561, 0.0
        %s1564 = scalar_lea.vmem %s6, 8
        %v1565 = vld [vmem:[%s1564] sm:$0xf]
        %v1567 = vsel %vm560, %v1565, 0
        %v1570 = vsel %vm564, %v1563, 0
        %1572 = vmatprep.subr.mxu0 0.0
        %1573 = vmatpush1.msra.mxu0 %v1570
        %1574 = vmatprep.subr.mxu0 0.0
        %1575 = vmatpush1.msra.mxu0 0.0
        %1576 = vmatprep.subr.mxu0 0.0
        %1577 = vmatpush1.msra.mxu0 0.0
        %1578 = vmatprep.subr.mxu0 0.0
        %1579 = vmatpush1.msra.mxu0 0.0
        %1580 = vmatprep.subr.mxu0 0.0
        %1581 = vmatpush1.msra.mxu0 0.0
        %1582 = vmatprep.subr.mxu0 0.0
        %1583 = vmatpush1.msra.mxu0 0.0
        %1584 = vmatprep.subr.mxu0 0.0
        %1585 = vmatpush1.msra.mxu0 0.0
        %1586 = vmatprep.subr.mxu0 0.0
        %1587 = vmatpush1.msra.mxu0 0.0
        %1588 = vmatprep.subr.mxu0 0.0
        %1589 = vmatpush1.msra.mxu0 0.0
        %1590 = vmatprep.subr.mxu0 0.0
        %1591 = vmatpush1.msra.mxu0 0.0
        %1592 = vmatprep.subr.mxu0 0.0
        %1593 = vmatpush1.msra.mxu0 0.0
        %1594 = vmatprep.subr.mxu0 0.0
        %1595 = vmatpush1.msra.mxu0 0.0
        %1596 = vmatprep.subr.mxu0 0.0
        %1597 = vmatpush1.msra.mxu0 0.0
        %1598 = vmatprep.subr.mxu0 0.0
        %1599 = vmatpush1.msra.mxu0 0.0
        %1600 = vmatprep.subr.mxu0 0.0
        %1601 = vmatpush1.msra.mxu0 0.0
        %1602 = vmatprep.subr.mxu0 0.0
        %1603 = vmatpush1.msra.mxu0 0.0
        %1604 = vmatprep.subr.mxu0 0.0
        %1605 = vmatpush1.msra.mxu0 0.0
        %1606 = vmatprep.subr.mxu0 0.0
        %1607 = vmatpush1.msra.mxu0 0.0
        %1608 = vmatprep.subr.mxu0 0.0
        %1609 = vmatpush1.msra.mxu0 0.0
        %1610 = vmatprep.subr.mxu0 0.0
        %1611 = vmatpush1.msra.mxu0 0.0
        %1612 = vmatprep.subr.mxu0 0.0
        %1613 = vmatpush1.msra.mxu0 0.0
        %1614 = vmatprep.subr.mxu0 0.0
        %1615 = vmatpush1.msra.mxu0 0.0
        %1616 = vmatprep.subr.mxu0 0.0
        %1617 = vmatpush1.msra.mxu0 0.0
        %1618 = vmatprep.subr.mxu0 0.0
        %1619 = vmatpush1.msra.mxu0 0.0
        %1620 = vmatprep.subr.mxu0 0.0
        %1621 = vmatpush1.msra.mxu0 0.0
        %1622 = vmatprep.subr.mxu0 0.0
        %1623 = vmatpush1.msra.mxu0 0.0
        %1624 = vmatprep.subr.mxu0 0.0
        %1625 = vmatpush1.msra.mxu0 0.0
        %1626 = vmatprep.subr.mxu0 0.0
        %1627 = vmatpush1.msra.mxu0 0.0
        %1628 = vmatprep.subr.mxu0 0.0
        %1629 = vmatpush1.msra.mxu0 0.0
        %1630 = vmatprep.subr.mxu0 0.0
        %1631 = vmatpush1.msra.mxu0 0.0
        %1632 = vmatprep.subr.mxu0 0.0
        %1633 = vmatpush1.msra.mxu0 0.0
        %1634 = vmatprep.subr.mxu0 0.0
        %1635 = vmatpush1.msra.mxu0 0.0
        %1636 = vmatprep.mubr.f32.mxu0 0.0
        %1637 = vmatmul.mubr.f32.gmra.mrb[0].mxu0 %v1567
        %v1638 = vpop.f32.mrb[0].mxu0
        %v1639 = vadd.f32 0.0, %v1638
        %v1640 = vpop.f32.mrb[0].mxu0
        %1641 = vdwg.mxu0
        %v1642 = vadd.f32 %v1550, %v1639
        %1643 = vrot.lane.b32.xlu0 %v1385, 112
        %v1644 = vpop.permute.xlu0 %1643
        %1645 = vrot.lane.b32.xlu0 %v1386, 112
        %v1646 = vpop.permute.xlu0 %1645
        %vm1647 = vcmask 916480
        %v1648 = vsel %vm1647, %v1644, %v1646
        %v1650 = vsel %vm1389, %v1648, 0.0
        %s1651 = scalar_lea.vmem %s6, 12
        %v1652 = vld [vmem:[%s1651] sm:$0xf]
        %v1654 = vsel %vm560, %v1652, 0
        %v1657 = vsel %vm564, %v1650, 0
        %1659 = vmatprep.subr.mxu0 0.0
        %1660 = vmatpush1.msra.mxu0 %v1657
        %1661 = vmatprep.subr.mxu0 0.0
        %1662 = vmatpush1.msra.mxu0 0.0
        %1663 = vmatprep.subr.mxu0 0.0
        %1664 = vmatpush1.msra.mxu0 0.0
        %1665 = vmatprep.subr.mxu0 0.0
        %1666 = vmatpush1.msra.mxu0 0.0
        %1667 = vmatprep.subr.mxu0 0.0
        %1668 = vmatpush1.msra.mxu0 0.0
        %1669 = vmatprep.subr.mxu0 0.0
        %1670 = vmatpush1.msra.mxu0 0.0
        %1671 = vmatprep.subr.mxu0 0.0
        %1672 = vmatpush1.msra.mxu0 0.0
        %1673 = vmatprep.subr.mxu0 0.0
        %1674 = vmatpush1.msra.mxu0 0.0
        %1675 = vmatprep.subr.mxu0 0.0
        %1676 = vmatpush1.msra.mxu0 0.0
        %1677 = vmatprep.subr.mxu0 0.0
        %1678 = vmatpush1.msra.mxu0 0.0
        %1679 = vmatprep.subr.mxu0 0.0
        %1680 = vmatpush1.msra.mxu0 0.0
        %1681 = vmatprep.subr.mxu0 0.0
        %1682 = vmatpush1.msra.mxu0 0.0
        %1683 = vmatprep.subr.mxu0 0.0
        %1684 = vmatpush1.msra.mxu0 0.0
        %1685 = vmatprep.subr.mxu0 0.0
        %1686 = vmatpush1.msra.mxu0 0.0
        %1687 = vmatprep.subr.mxu0 0.0
        %1688 = vmatpush1.msra.mxu0 0.0
        %1689 = vmatprep.subr.mxu0 0.0
        %1690 = vmatpush1.msra.mxu0 0.0
        %1691 = vmatprep.subr.mxu0 0.0
        %1692 = vmatpush1.msra.mxu0 0.0
        %1693 = vmatprep.subr.mxu0 0.0
        %1694 = vmatpush1.msra.mxu0 0.0
        %1695 = vmatprep.subr.mxu0 0.0
        %1696 = vmatpush1.msra.mxu0 0.0
        %1697 = vmatprep.subr.mxu0 0.0
        %1698 = vmatpush1.msra.mxu0 0.0
        %1699 = vmatprep.subr.mxu0 0.0
        %1700 = vmatpush1.msra.mxu0 0.0
        %1701 = vmatprep.subr.mxu0 0.0
        %1702 = vmatpush1.msra.mxu0 0.0
        %1703 = vmatprep.subr.mxu0 0.0
        %1704 = vmatpush1.msra.mxu0 0.0
        %1705 = vmatprep.subr.mxu0 0.0
        %1706 = vmatpush1.msra.mxu0 0.0
        %1707 = vmatprep.subr.mxu0 0.0
        %1708 = vmatpush1.msra.mxu0 0.0
        %1709 = vmatprep.subr.mxu0 0.0
        %1710 = vmatpush1.msra.mxu0 0.0
        %1711 = vmatprep.subr.mxu0 0.0
        %1712 = vmatpush1.msra.mxu0 0.0
        %1713 = vmatprep.subr.mxu0 0.0
        %1714 = vmatpush1.msra.mxu0 0.0
        %1715 = vmatprep.subr.mxu0 0.0
        %1716 = vmatpush1.msra.mxu0 0.0
        %1717 = vmatprep.subr.mxu0 0.0
        %1718 = vmatpush1.msra.mxu0 0.0
        %1719 = vmatprep.subr.mxu0 0.0
        %1720 = vmatpush1.msra.mxu0 0.0
        %1721 = vmatprep.subr.mxu0 0.0
        %1722 = vmatpush1.msra.mxu0 0.0
        %1723 = vmatprep.mubr.f32.mxu0 0.0
        %1724 = vmatmul.mubr.f32.gmra.mrb[0].mxu0 %v1654
        %v1725 = vpop.f32.mrb[0].mxu0
        %v1726 = vadd.f32 0.0, %v1725
        %v1727 = vpop.f32.mrb[0].mxu0
        %1728 = vdwg.mxu0
        %v1729 = vadd.f32 %v1642, %v1726
        %s1730 = scalar_lea.vmem %s6, 16
        %v1731 = vld [vmem:[%s1730] sm:$0xf]
        %1732 = vrot.lane.b32.xlu0 %v1385, 111
        %v1733 = vpop.permute.xlu0 %1732
        %1734 = vrot.lane.b32.xlu0 %v1386, 111
        %v1735 = vpop.permute.xlu0 %1734
        %vm1736 = vcmask 908288
        %v1737 = vsel %vm1736, %v1733, %v1735
        %v1739 = vsel %vm560, %v1731, 0
        %v1741 = vsel %vm564, %v1737, 0
        %1743 = vmatprep.subr.mxu0 0.0
        %1744 = vmatpush1.msra.mxu0 %v1741
        %1745 = vmatprep.subr.mxu0 0.0
        %1746 = vmatpush1.msra.mxu0 0.0
        %1747 = vmatprep.subr.mxu0 0.0
        %1748 = vmatpush1.msra.mxu0 0.0
        %1749 = vmatprep.subr.mxu0 0.0
        %1750 = vmatpush1.msra.mxu0 0.0
        %1751 = vmatprep.subr.mxu0 0.0
        %1752 = vmatpush1.msra.mxu0 0.0
        %1753 = vmatprep.subr.mxu0 0.0
        %1754 = vmatpush1.msra.mxu0 0.0
        %1755 = vmatprep.subr.mxu0 0.0
        %1756 = vmatpush1.msra.mxu0 0.0
        %1757 = vmatprep.subr.mxu0 0.0
        %1758 = vmatpush1.msra.mxu0 0.0
        %1759 = vmatprep.subr.mxu0 0.0
        %1760 = vmatpush1.msra.mxu0 0.0
        %1761 = vmatprep.subr.mxu0 0.0
        %1762 = vmatpush1.msra.mxu0 0.0
        %1763 = vmatprep.subr.mxu0 0.0
        %1764 = vmatpush1.msra.mxu0 0.0
        %1765 = vmatprep.subr.mxu0 0.0
        %1766 = vmatpush1.msra.mxu0 0.0
        %1767 = vmatprep.subr.mxu0 0.0
        %1768 = vmatpush1.msra.mxu0 0.0
        %1769 = vmatprep.subr.mxu0 0.0
        %1770 = vmatpush1.msra.mxu0 0.0
        %1771 = vmatprep.subr.mxu0 0.0
        %1772 = vmatpush1.msra.mxu0 0.0
        %1773 = vmatprep.subr.mxu0 0.0
        %1774 = vmatpush1.msra.mxu0 0.0
        %1775 = vmatprep.subr.mxu0 0.0
        %1776 = vmatpush1.msra.mxu0 0.0
        %1777 = vmatprep.subr.mxu0 0.0
        %1778 = vmatpush1.msra.mxu0 0.0
        %1779 = vmatprep.subr.mxu0 0.0
        %1780 = vmatpush1.msra.mxu0 0.0
        %1781 = vmatprep.subr.mxu0 0.0
        %1782 = vmatpush1.msra.mxu0 0.0
        %1783 = vmatprep.subr.mxu0 0.0
        %1784 = vmatpush1.msra.mxu0 0.0
        %1785 = vmatprep.subr.mxu0 0.0
        %1786 = vmatpush1.msra.mxu0 0.0
        %1787 = vmatprep.subr.mxu0 0.0
        %1788 = vmatpush1.msra.mxu0 0.0
        %1789 = vmatprep.subr.mxu0 0.0
        %1790 = vmatpush1.msra.mxu0 0.0
        %1791 = vmatprep.subr.mxu0 0.0
        %1792 = vmatpush1.msra.mxu0 0.0
        %1793 = vmatprep.subr.mxu0 0.0
        %1794 = vmatpush1.msra.mxu0 0.0
        %1795 = vmatprep.subr.mxu0 0.0
        %1796 = vmatpush1.msra.mxu0 0.0
        %1797 = vmatprep.subr.mxu0 0.0
        %1798 = vmatpush1.msra.mxu0 0.0
        %1799 = vmatprep.subr.mxu0 0.0
        %1800 = vmatpush1.msra.mxu0 0.0
        %1801 = vmatprep.subr.mxu0 0.0
        %1802 = vmatpush1.msra.mxu0 0.0
        %1803 = vmatprep.subr.mxu0 0.0
        %1804 = vmatpush1.msra.mxu0 0.0
        %1805 = vmatprep.subr.mxu0 0.0
        %1806 = vmatpush1.msra.mxu0 0.0
        %1807 = vmatprep.mubr.f32.mxu0 0.0
        %1808 = vmatmul.mubr.f32.gmra.mrb[0].mxu0 %v1739
        %v1809 = vpop.f32.mrb[0].mxu0
        %v1810 = vadd.f32 0.0, %v1809
        %v1811 = vpop.f32.mrb[0].mxu0
        %1812 = vdwg.mxu0
        %v1813 = vadd.f32 %v1729, %v1810
        %1814 = vrot.lane.b32.xlu0 %v1385, 110
        %v1815 = vpop.permute.xlu0 %1814
        %1816 = vrot.lane.b32.xlu0 %v1386, 110
        %v1817 = vpop.permute.xlu0 %1816
        %vm1818 = vcmask 900096
        %v1819 = vsel %vm1818, %v1815, %v1817
        %v1821 = vsel %vm1555, %v1819, 0.0
        %s1822 = scalar_lea.vmem %s6, 20
        %v1823 = vld [vmem:[%s1822] sm:$0xf]
        %v1825 = vsel %vm560, %v1823, 0
        %v1828 = vsel %vm564, %v1821, 0
        %1830 = vmatprep.subr.mxu0 0.0
        %1831 = vmatpush1.msra.mxu0 %v1828
        %1832 = vmatprep.subr.mxu0 0.0
        %1833 = vmatpush1.msra.mxu0 0.0
        %1834 = vmatprep.subr.mxu0 0.0
        %1835 = vmatpush1.msra.mxu0 0.0
        %1836 = vmatprep.subr.mxu0 0.0
        %1837 = vmatpush1.msra.mxu0 0.0
        %1838 = vmatprep.subr.mxu0 0.0
        %1839 = vmatpush1.msra.mxu0 0.0
        %1840 = vmatprep.subr.mxu0 0.0
        %1841 = vmatpush1.msra.mxu0 0.0
        %1842 = vmatprep.subr.mxu0 0.0
        %1843 = vmatpush1.msra.mxu0 0.0
        %1844 = vmatprep.subr.mxu0 0.0
        %1845 = vmatpush1.msra.mxu0 0.0
        %1846 = vmatprep.subr.mxu0 0.0
        %1847 = vmatpush1.msra.mxu0 0.0
        %1848 = vmatprep.subr.mxu0 0.0
        %1849 = vmatpush1.msra.mxu0 0.0
        %1850 = vmatprep.subr.mxu0 0.0
        %1851 = vmatpush1.msra.mxu0 0.0
        %1852 = vmatprep.subr.mxu0 0.0
        %1853 = vmatpush1.msra.mxu0 0.0
        %1854 = vmatprep.subr.mxu0 0.0
        %1855 = vmatpush1.msra.mxu0 0.0
        %1856 = vmatprep.subr.mxu0 0.0
        %1857 = vmatpush1.msra.mxu0 0.0
        %1858 = vmatprep.subr.mxu0 0.0
        %1859 = vmatpush1.msra.mxu0 0.0
        %1860 = vmatprep.subr.mxu0 0.0
        %1861 = vmatpush1.msra.mxu0 0.0
        %1862 = vmatprep.subr.mxu0 0.0
        %1863 = vmatpush1.msra.mxu0 0.0
        %1864 = vmatprep.subr.mxu0 0.0
        %1865 = vmatpush1.msra.mxu0 0.0
        %1866 = vmatprep.subr.mxu0 0.0
        %1867 = vmatpush1.msra.mxu0 0.0
        %1868 = vmatprep.subr.mxu0 0.0
        %1869 = vmatpush1.msra.mxu0 0.0
        %1870 = vmatprep.subr.mxu0 0.0
        %1871 = vmatpush1.msra.mxu0 0.0
        %1872 = vmatprep.subr.mxu0 0.0
        %1873 = vmatpush1.msra.mxu0 0.0
        %1874 = vmatprep.subr.mxu0 0.0
        %1875 = vmatpush1.msra.mxu0 0.0
        %1876 = vmatprep.subr.mxu0 0.0
        %1877 = vmatpush1.msra.mxu0 0.0
        %1878 = vmatprep.subr.mxu0 0.0
        %1879 = vmatpush1.msra.mxu0 0.0
        %1880 = vmatprep.subr.mxu0 0.0
        %1881 = vmatpush1.msra.mxu0 0.0
        %1882 = vmatprep.subr.mxu0 0.0
        %1883 = vmatpush1.msra.mxu0 0.0
        %1884 = vmatprep.subr.mxu0 0.0
        %1885 = vmatpush1.msra.mxu0 0.0
        %1886 = vmatprep.subr.mxu0 0.0
        %1887 = vmatpush1.msra.mxu0 0.0
        %1888 = vmatprep.subr.mxu0 0.0
        %1889 = vmatpush1.msra.mxu0 0.0
        %1890 = vmatprep.subr.mxu0 0.0
        %1891 = vmatpush1.msra.mxu0 0.0
        %1892 = vmatprep.subr.mxu0 0.0
        %1893 = vmatpush1.msra.mxu0 0.0
        %1894 = vmatprep.mubr.f32.mxu0 0.0
        %1895 = vmatmul.mubr.f32.gmra.mrb[0].mxu0 %v1825
        %v1896 = vpop.f32.mrb[0].mxu0
        %v1897 = vadd.f32 0.0, %v1896
        %v1898 = vpop.f32.mrb[0].mxu0
        %1899 = vdwg.mxu0
        %v1900 = vadd.f32 %v1813, %v1897
        %1901 = vrot.lane.b32.xlu0 %v1385, 96
        %v1902 = vpop.permute.xlu0 %1901
        %1903 = vrot.lane.b32.xlu0 %v1386, 96
        %v1904 = vpop.permute.xlu0 %1903
        %v1905 = vsel %vm730, %v1902, %v1904
        %v1907 = vsel %vm1389, %v1905, 0.0
        %s1908 = scalar_lea.vmem %s6, 24
        %v1909 = vld [vmem:[%s1908] sm:$0xf]
        %v1911 = vsel %vm560, %v1909, 0
        %v1914 = vsel %vm564, %v1907, 0
        %1916 = vmatprep.subr.mxu0 0.0
        %1917 = vmatpush1.msra.mxu0 %v1914
        %1918 = vmatprep.subr.mxu0 0.0
        %1919 = vmatpush1.msra.mxu0 0.0
        %1920 = vmatprep.subr.mxu0 0.0
        %1921 = vmatpush1.msra.mxu0 0.0
        %1922 = vmatprep.subr.mxu0 0.0
        %1923 = vmatpush1.msra.mxu0 0.0
        %1924 = vmatprep.subr.mxu0 0.0
        %1925 = vmatpush1.msra.mxu0 0.0
        %1926 = vmatprep.subr.mxu0 0.0
        %1927 = vmatpush1.msra.mxu0 0.0
        %1928 = vmatprep.subr.mxu0 0.0
        %1929 = vmatpush1.msra.mxu0 0.0
        %1930 = vmatprep.subr.mxu0 0.0
        %1931 = vmatpush1.msra.mxu0 0.0
        %1932 = vmatprep.subr.mxu0 0.0
        %1933 = vmatpush1.msra.mxu0 0.0
        %1934 = vmatprep.subr.mxu0 0.0
        %1935 = vmatpush1.msra.mxu0 0.0
        %1936 = vmatprep.subr.mxu0 0.0
        %1937 = vmatpush1.msra.mxu0 0.0
        %1938 = vmatprep.subr.mxu0 0.0
        %1939 = vmatpush1.msra.mxu0 0.0
        %1940 = vmatprep.subr.mxu0 0.0
        %1941 = vmatpush1.msra.mxu0 0.0
        %1942 = vmatprep.subr.mxu0 0.0
        %1943 = vmatpush1.msra.mxu0 0.0
        %1944 = vmatprep.subr.mxu0 0.0
        %1945 = vmatpush1.msra.mxu0 0.0
        %1946 = vmatprep.subr.mxu0 0.0
        %1947 = vmatpush1.msra.mxu0 0.0
        %1948 = vmatprep.subr.mxu0 0.0
        %1949 = vmatpush1.msra.mxu0 0.0
        %1950 = vmatprep.subr.mxu0 0.0
        %1951 = vmatpush1.msra.mxu0 0.0
        %1952 = vmatprep.subr.mxu0 0.0
        %1953 = vmatpush1.msra.mxu0 0.0
        %1954 = vmatprep.subr.mxu0 0.0
        %1955 = vmatpush1.msra.mxu0 0.0
        %1956 = vmatprep.subr.mxu0 0.0
        %1957 = vmatpush1.msra.mxu0 0.0
        %1958 = vmatprep.subr.mxu0 0.0
        %1959 = vmatpush1.msra.mxu0 0.0
        %1960 = vmatprep.subr.mxu0 0.0
        %1961 = vmatpush1.msra.mxu0 0.0
        %1962 = vmatprep.subr.mxu0 0.0
        %1963 = vmatpush1.msra.mxu0 0.0
        %1964 = vmatprep.subr.mxu0 0.0
        %1965 = vmatpush1.msra.mxu0 0.0
        %1966 = vmatprep.subr.mxu0 0.0
        %1967 = vmatpush1.msra.mxu0 0.0
        %1968 = vmatprep.subr.mxu0 0.0
        %1969 = vmatpush1.msra.mxu0 0.0
        %1970 = vmatprep.subr.mxu0 0.0
        %1971 = vmatpush1.msra.mxu0 0.0
        %1972 = vmatprep.subr.mxu0 0.0
        %1973 = vmatpush1.msra.mxu0 0.0
        %1974 = vmatprep.subr.mxu0 0.0
        %1975 = vmatpush1.msra.mxu0 0.0
        %1976 = vmatprep.subr.mxu0 0.0
        %1977 = vmatpush1.msra.mxu0 0.0
        %1978 = vmatprep.subr.mxu0 0.0
        %1979 = vmatpush1.msra.mxu0 0.0
        %1980 = vmatprep.mubr.f32.mxu0 0.0
        %1981 = vmatmul.mubr.f32.gmra.mrb[0].mxu0 %v1911
        %v1982 = vpop.f32.mrb[0].mxu0
        %v1983 = vadd.f32 0.0, %v1982
        %v1984 = vpop.f32.mrb[0].mxu0
        %1985 = vdwg.mxu0
        %v1986 = vadd.f32 %v1900, %v1983
        %s1987 = scalar_lea.vmem %s6, 28
        %v1988 = vld [vmem:[%s1987] sm:$0xf]
        %1989 = vrot.lane.b32.xlu0 %v1385, 95
        %v1990 = vpop.permute.xlu0 %1989
        %1991 = vrot.lane.b32.xlu0 %v1386, 95
        %v1992 = vpop.permute.xlu0 %1991
        %vm1993 = vcmask 777216
        %v1994 = vsel %vm1993, %v1990, %v1992
        %v1996 = vsel %vm560, %v1988, 0
        %v1998 = vsel %vm564, %v1994, 0
        %2000 = vmatprep.subr.mxu0 0.0
        %2001 = vmatpush1.msra.mxu0 %v1998
        %2002 = vmatprep.subr.mxu0 0.0
        %2003 = vmatpush1.msra.mxu0 0.0
        %2004 = vmatprep.subr.mxu0 0.0
        %2005 = vmatpush1.msra.mxu0 0.0
        %2006 = vmatprep.subr.mxu0 0.0
        %2007 = vmatpush1.msra.mxu0 0.0
        %2008 = vmatprep.subr.mxu0 0.0
        %2009 = vmatpush1.msra.mxu0 0.0
        %2010 = vmatprep.subr.mxu0 0.0
        %2011 = vmatpush1.msra.mxu0 0.0
        %2012 = vmatprep.subr.mxu0 0.0
        %2013 = vmatpush1.msra.mxu0 0.0
        %2014 = vmatprep.subr.mxu0 0.0
        %2015 = vmatpush1.msra.mxu0 0.0
        %2016 = vmatprep.subr.mxu0 0.0
        %2017 = vmatpush1.msra.mxu0 0.0
        %2018 = vmatprep.subr.mxu0 0.0
        %2019 = vmatpush1.msra.mxu0 0.0
        %2020 = vmatprep.subr.mxu0 0.0
        %2021 = vmatpush1.msra.mxu0 0.0
        %2022 = vmatprep.subr.mxu0 0.0
        %2023 = vmatpush1.msra.mxu0 0.0
        %2024 = vmatprep.subr.mxu0 0.0
        %2025 = vmatpush1.msra.mxu0 0.0
        %2026 = vmatprep.subr.mxu0 0.0
        %2027 = vmatpush1.msra.mxu0 0.0
        %2028 = vmatprep.subr.mxu0 0.0
        %2029 = vmatpush1.msra.mxu0 0.0
        %2030 = vmatprep.subr.mxu0 0.0
        %2031 = vmatpush1.msra.mxu0 0.0
        %2032 = vmatprep.subr.mxu0 0.0
        %2033 = vmatpush1.msra.mxu0 0.0
        %2034 = vmatprep.subr.mxu0 0.0
        %2035 = vmatpush1.msra.mxu0 0.0
        %2036 = vmatprep.subr.mxu0 0.0
        %2037 = vmatpush1.msra.mxu0 0.0
        %2038 = vmatprep.subr.mxu0 0.0
        %2039 = vmatpush1.msra.mxu0 0.0
        %2040 = vmatprep.subr.mxu0 0.0
        %2041 = vmatpush1.msra.mxu0 0.0
        %2042 = vmatprep.subr.mxu0 0.0
        %2043 = vmatpush1.msra.mxu0 0.0
        %2044 = vmatprep.subr.mxu0 0.0
        %2045 = vmatpush1.msra.mxu0 0.0
        %2046 = vmatprep.subr.mxu0 0.0
        %2047 = vmatpush1.msra.mxu0 0.0
        %2048 = vmatprep.subr.mxu0 0.0
        %2049 = vmatpush1.msra.mxu0 0.0
        %2050 = vmatprep.subr.mxu0 0.0
        %2051 = vmatpush1.msra.mxu0 0.0
        %2052 = vmatprep.subr.mxu0 0.0
        %2053 = vmatpush1.msra.mxu0 0.0
        %2054 = vmatprep.subr.mxu0 0.0
        %2055 = vmatpush1.msra.mxu0 0.0
        %2056 = vmatprep.subr.mxu0 0.0
        %2057 = vmatpush1.msra.mxu0 0.0
        %2058 = vmatprep.subr.mxu0 0.0
        %2059 = vmatpush1.msra.mxu0 0.0
        %2060 = vmatprep.subr.mxu0 0.0
        %2061 = vmatpush1.msra.mxu0 0.0
        %2062 = vmatprep.subr.mxu0 0.0
        %2063 = vmatpush1.msra.mxu0 0.0
        %2064 = vmatprep.mubr.f32.mxu0 0.0
        %2065 = vmatmul.mubr.f32.gmra.mrb[0].mxu0 %v1996
        %v2066 = vpop.f32.mrb[0].mxu0
        %v2067 = vadd.f32 0.0, %v2066
        %v2068 = vpop.f32.mrb[0].mxu0
        %2069 = vdwg.mxu0
        %v2070 = vadd.f32 %v1986, %v2067
        %2071 = vrot.lane.b32.xlu0 %v1385, 94
        %v2072 = vpop.permute.xlu0 %2071
        %2073 = vrot.lane.b32.xlu0 %v1386, 94
        %v2074 = vpop.permute.xlu0 %2073
        %vm2075 = vcmask 769024
        %v2076 = vsel %vm2075, %v2072, %v2074
        %v2078 = vsel %vm1555, %v2076, 0.0
        %s2079 = scalar_lea.vmem %s6, 32
        %v2080 = vld [vmem:[%s2079] sm:$0xf]
        %v2082 = vsel %vm560, %v2080, 0
        %v2085 = vsel %vm564, %v2078, 0
        %2087 = vmatprep.subr.mxu0 0.0
        %2088 = vmatpush1.msra.mxu0 %v2085
        %2089 = vmatprep.subr.mxu0 0.0
        %2090 = vmatpush1.msra.mxu0 0.0
        %2091 = vmatprep.subr.mxu0 0.0
        %2092 = vmatpush1.msra.mxu0 0.0
        %2093 = vmatprep.subr.mxu0 0.0
        %2094 = vmatpush1.msra.mxu0 0.0
        %2095 = vmatprep.subr.mxu0 0.0
        %2096 = vmatpush1.msra.mxu0 0.0
        %2097 = vmatprep.subr.mxu0 0.0
        %2098 = vmatpush1.msra.mxu0 0.0
        %2099 = vmatprep.subr.mxu0 0.0
        %2100 = vmatpush1.msra.mxu0 0.0
        %2101 = vmatprep.subr.mxu0 0.0
        %2102 = vmatpush1.msra.mxu0 0.0
        %2103 = vmatprep.subr.mxu0 0.0
        %2104 = vmatpush1.msra.mxu0 0.0
        %2105 = vmatprep.subr.mxu0 0.0
        %2106 = vmatpush1.msra.mxu0 0.0
        %2107 = vmatprep.subr.mxu0 0.0
        %2108 = vmatpush1.msra.mxu0 0.0
        %2109 = vmatprep.subr.mxu0 0.0
        %2110 = vmatpush1.msra.mxu0 0.0
        %2111 = vmatprep.subr.mxu0 0.0
        %2112 = vmatpush1.msra.mxu0 0.0
        %2113 = vmatprep.subr.mxu0 0.0
        %2114 = vmatpush1.msra.mxu0 0.0
        %2115 = vmatprep.subr.mxu0 0.0
        %2116 = vmatpush1.msra.mxu0 0.0
        %2117 = vmatprep.subr.mxu0 0.0
        %2118 = vmatpush1.msra.mxu0 0.0
        %2119 = vmatprep.subr.mxu0 0.0
        %2120 = vmatpush1.msra.mxu0 0.0
        %2121 = vmatprep.subr.mxu0 0.0
        %2122 = vmatpush1.msra.mxu0 0.0
        %2123 = vmatprep.subr.mxu0 0.0
        %2124 = vmatpush1.msra.mxu0 0.0
        %2125 = vmatprep.subr.mxu0 0.0
        %2126 = vmatpush1.msra.mxu0 0.0
        %2127 = vmatprep.subr.mxu0 0.0
        %2128 = vmatpush1.msra.mxu0 0.0
        %2129 = vmatprep.subr.mxu0 0.0
        %2130 = vmatpush1.msra.mxu0 0.0
        %2131 = vmatprep.subr.mxu0 0.0
        %2132 = vmatpush1.msra.mxu0 0.0
        %2133 = vmatprep.subr.mxu0 0.0
        %2134 = vmatpush1.msra.mxu0 0.0
        %2135 = vmatprep.subr.mxu0 0.0
        %2136 = vmatpush1.msra.mxu0 0.0
        %2137 = vmatprep.subr.mxu0 0.0
        %2138 = vmatpush1.msra.mxu0 0.0
        %2139 = vmatprep.subr.mxu0 0.0
        %2140 = vmatpush1.msra.mxu0 0.0
        %2141 = vmatprep.subr.mxu0 0.0
        %2142 = vmatpush1.msra.mxu0 0.0
        %2143 = vmatprep.subr.mxu0 0.0
        %2144 = vmatpush1.msra.mxu0 0.0
        %2145 = vmatprep.subr.mxu0 0.0
        %2146 = vmatpush1.msra.mxu0 0.0
        %2147 = vmatprep.subr.mxu0 0.0
        %2148 = vmatpush1.msra.mxu0 0.0
        %2149 = vmatprep.subr.mxu0 0.0
        %2150 = vmatpush1.msra.mxu0 0.0
        %2151 = vmatprep.mubr.f32.mxu0 0.0
        %2152 = vmatmul.mubr.f32.gmra.mrb[0].mxu0 %v2082
        %v2153 = vpop.f32.mrb[0].mxu0
        %v2154 = vadd.f32 0.0, %v2153
        %v2155 = vpop.f32.mrb[0].mxu0
        %2156 = vdwg.mxu0
        %v2157 = vadd.f32 %v2070, %v2154
        %v2158 = vld [vmem:[%s7] sm:$0xf]
        %2160 = vset.pattern.permute.xlu0 0
        %2161 = vperm.xlu0 %2160, %v2158
        %v2162 = vpop.permute.xlu0 %2161
        %v2164 = vadd.f32 %v2157, %v2162
        %s2165 = sld [smem:[#allocation2]]
        %s2166 = sld [smem:[#allocation2 + $0x1]]
        %v2167 = vstv %s2165
        %v2168 = vmul.f32 %v2167, %v2164
        %v2169 = vstv %s2166
        %v2170 = vmul.f32 %v2169, %v450
        %v2171 = vadd.f32 %v2168, %v2170
        %2172 = vst [vmem:[%s410] sm:$0xf] %v2171
        %s2173 = sand.u32 %s246, 1
        %s2174 = scalar_lea.sflag [#allocation3], %s2173
        %s2175 = sand.u32 %s246, 1
        %s2176 = smul.addr %s2175, 4
        %s2177 = scalar_lea.vmem [#allocation5], %s2176
        // Predicated region
        $region57: #{tpu_custom_call.1} parent=51 // pred_check
          %p2178 = pneg %p256
        $region58: #{tpu_custom_call.1} parent=51 // pred_check_branch
          %2180 = sbr.rel (%p2178) target = $region60
        $region59: #{tpu_custom_call.1} parent=51 // pred_region
          %s2182 = ssub.s32 64, 64
          %2183 = vsyncadd %s2174, %s2182
          %s2184 = smul.addr %s27, 2
          %s2185 = sadd.s32 %s28, %s2184
          %s2186 = smul.addr %s2185, 64
          %s2187 = scalar_lea.hbm %s8, %s2186
          %s2189 = sshll.u32 %s2177, 4
          %s2190 = int_to_ptr.vmem [resolvable:$true] %s2189
          %2192 = dma.vmem_to_hbm [thread:$0]  %s2190, 64, %s2187, %s2174
        $region60: #{tpu_custom_call.1} parent=51 // pred_fallthru
          _
      $region52: #{tpu_custom_call.1} parent=5 // pred_fallthru
        _
      %p2193 = scmp.le.s32.totalorder 2, %s18
      // Predicated region
      $region61: #{tpu_custom_call.1} parent=5 // pred_check
        %p2194 = pneg %p2193
      $region62: #{tpu_custom_call.1} parent=5 // pred_check_branch
        %2196 = sbr.rel (%p2194) target = $region64
      $region63: #{tpu_custom_call.1} parent=5 // pred_region
        %s2197 = ssub.s32 %s18, 2
        // Predicated region
        $region65: #{tpu_custom_call.1} parent=63 // pred_check
          %p2198 = pneg %p262
        $region66: #{tpu_custom_call.1} parent=63 // pred_check_branch
          %2200 = sbr.rel (%p2198) target = $region68
        $region67: #{tpu_custom_call.1} parent=63 // pred_region
          %s2201 = sand.u32 %s247, 1
          %s2202 = scalar_lea.sflag [#allocation3], %s2201
          %s2203 = sand.u32 %s247, 1
          %s2204 = smul.addr %s2203, 4
          %s2205 = scalar_lea.vmem [#allocation5], %s2204
          %2206 = dma.done %s2202, 64
        $region68: #{tpu_custom_call.1} parent=63 // pred_fallthru
          _
      $region64: #{tpu_custom_call.1} parent=5 // pred_fallthru
        _
    $region6: #{tpu_custom_call.1} parent=1 // loop_footer
      %s22 = sadd.s32 1, %s18
    $region7: #{tpu_custom_call.1} parent=1 // loop_footer_branch
      %17 = sbr.rel target = $region3
    $region8: #{tpu_custom_call.1} parent=1 // loop_exit
      _
    %2207 = vsyncpa [#allocation3], 1
    %s2208 = scalar_lea.sflag [#allocation3], 1
    %2209 = vsyncpa %s2208, 1
    %2210 = vsyncpa [#allocation4], 1
    %s2211 = scalar_lea.sflag [#allocation4], 1
    %2212 = vsyncpa %s2211, 1

</llo_original>
